<compile_context>
chip_gen: v7x
topology: tpu7x:2x2x1
jax: 0.10.0
libtpu: 0.0.40
codegen_flags: <defaults>
</compile_context>

<pallas_src>
import functools

import jax
import jax.numpy as jnp
from jax import lax
from jax.experimental import pallas as pl
from jax.experimental.pallas import tpu as pltpu


def _mha_kernel(x_ref, wqkv_ref, bqkv_ref, wo_ref, bo_ref, o_ref, *,
                num_heads, head_dim):
    """One grid step == one batch element (all heads processed inside)."""
    x = x_ref[0]                                   # (N, D), activation dtype
    dt = x.dtype
    N, D = x.shape
    H, hd = num_heads, head_dim

    # Fused QKV projection: a single lane-dense (N, 3D) MXU launch.  Weights
    # arrive pre-transposed / pre-scaled; the bias is added in f32.
    qkv = (jnp.dot(x, wqkv_ref[...], preferred_element_type=jnp.float32)
           + bqkv_ref[...]).astype(dt)             # (N, 3D)
    q = qkv[:, 0:D]            # 1/sqrt(hd) already folded into W_q / b_q
    k = qkv[:, D:2 * D]
    v = qkv[:, 2 * D:3 * D]

    # Per-head attention + per-head fold of the output projection, summed in
    # f32 values; only one (N, N) score matrix is live at a time and the
    # output block is written exactly once per grid step.
    acc = jnp.zeros((N, D), jnp.float32)
    for h in range(H):                             # static unroll over heads
        lo = h * hd
        q_h = q[:, lo:lo + hd]                     # (N, hd)
        k_h = k[:, lo:lo + hd]
        v_h = v[:, lo:lo + hd]

        # sim = q_h @ k_h^T as a contraction over hd (no XLU transpose of k).
        sim = lax.dot_general(q_h, k_h, (((1,), (1,)), ((), ())),
                              preferred_element_type=jnp.float32)   # (N, N)

        # Numerically stable softmax; divide -> EUP reciprocal + multiply.
        sim_max = jnp.max(sim, axis=-1, keepdims=True)
        p = jnp.exp(sim - sim_max)
        inv = pl.reciprocal(jnp.sum(p, axis=-1, keepdims=True), approx=True)
        p = (p * inv).astype(dt)

        head_out = jnp.dot(p, v_h, preferred_element_type=jnp.float32)  # (N, hd)

        # Fold the output projection per head: acc += head_out @ W_out.T[h].
        acc = acc + jnp.dot(head_out.astype(dt), wo_ref[h],
                            preferred_element_type=jnp.float32)         # (N, D)

    o_ref[0] = (acc + bo_ref[...]).astype(o_ref.dtype)


def _prepare_params(in_proj_weight, in_proj_bias, out_proj_weight, out_proj_bias,
                    num_heads, dtype):
    """Pre-transpose / pre-fuse / pre-scale all parameters outside the kernel."""
    D = in_proj_weight.shape[1]
    H = num_heads
    hd = D // H
    scaling = float(hd) ** (-0.5)

    w_q, w_k, w_v = jnp.split(in_proj_weight, 3, axis=0)   # each (D, D)
    b_q, b_k, b_v = jnp.split(in_proj_bias, 3, axis=0)     # each (D,)

    # Fused projection weight (D, 3D), columns ordered [Q | K | V], with the
    # 1/sqrt(hd) scaling folded into the Q columns.  Weights are cast to the
    # activation dtype (native bf16 MXU path when activations are bf16);
    # biases stay f32 and are added to the f32 matmul result.
    wqkv = jnp.concatenate([w_q.T * scaling, w_k.T, w_v.T], axis=1).astype(dtype)
    bqkv = jnp.concatenate([b_q * scaling, b_k, b_v]).reshape(1, 3 * D)
    bqkv = bqkv.astype(jnp.float32)

    # Output projection out = attn_out @ W_out.T + b_out, with W_out.T split
    # by head along its attention-feature rows: (H, hd, D).
    wo = jnp.transpose(out_proj_weight).reshape(H, hd, D).astype(dtype)
    bo = out_proj_bias.reshape(1, D).astype(jnp.float32)
    return wqkv, bqkv, wo, bo


def attention_pallas(x, in_proj_weight, in_proj_bias, out_proj_weight, out_proj_bias,
                     num_heads: int):
    B, N, D = x.shape
    H = num_heads
    hd = D // H
    assert hd * H == D, "embed_dim must be divisible by num_heads"

    wqkv, bqkv, wo, bo = _prepare_params(
        in_proj_weight, in_proj_bias, out_proj_weight, out_proj_bias,
        num_heads, x.dtype)

    kernel = functools.partial(_mha_kernel, num_heads=H, head_dim=hd)

    return pl.pallas_call(
        kernel,
        out_shape=jax.ShapeDtypeStruct((B, N, D), x.dtype),
        grid_spec=pltpu.PrefetchScalarGridSpec(
            num_scalar_prefetch=0,
            grid=(B,),
            in_specs=[
                pl.BlockSpec((1, N, D), lambda b: (b, 0, 0)),       # x
                # Constant block index across the grid -> each weight array is
                # DMA'd once and stays VMEM-resident (no per-batch re-read).
                pl.BlockSpec((D, 3 * D), lambda b: (0, 0)),         # wqkv
                pl.BlockSpec((1, 3 * D), lambda b: (0, 0)),         # bqkv (f32)
                pl.BlockSpec((H, hd, D), lambda b: (0, 0, 0)),      # wo
                pl.BlockSpec((1, D), lambda b: (0, 0)),             # bo (f32)
            ],
            out_specs=pl.BlockSpec((1, N, D), lambda b: (b, 0, 0)),
        ),
        compiler_params=pltpu.CompilerParams(
            dimension_semantics=("parallel",),
            # Raise v5e's 16 MiB default scoped VMEM; stays under v7x's 64 MiB.
            vmem_limit_bytes=48 * 1024 * 1024),
    )(x, wqkv, bqkv, wo, bo)


def attention_reference(x, in_proj_weight, in_proj_bias, out_proj_weight, out_proj_bias,
                        num_heads: int):
    """Plain-JAX reference mirroring the PyTorch forward."""
    B, N, D = x.shape
    hd = D // num_heads
    scaling = float(hd) ** (-0.5)
    qkv = x @ in_proj_weight.T + in_proj_bias
    q, k, v = jnp.split(qkv, 3, axis=-1)
    q = q * scaling

    def to_heads(t):
        return t.reshape(B, N, num_heads, hd).transpose(0, 2, 1, 3).reshape(
            B * num_heads, N, hd)

    qh, kh, vh = to_heads(q), to_heads(k), to_heads(v)
    sim = jnp.einsum('bid,bjd->bij', qh, kh)
    p = jax.nn.softmax(sim, axis=-1)
    out = jnp.einsum('bij,bjd->bid', p, vh)
    out = out.reshape(B, num_heads, N, hd).transpose(0, 2, 1, 3).reshape(B, N, D)
    return out @ out_proj_weight.T + out_proj_bias


if __name__ == "__main__":
    # Small shapes consistent with the module: batch=2, seq=8, embed_dim=32, heads=4.
    B, N, D, H = 2, 8, 32, 4

    key = jax.random.PRNGKey(0)
    k_x, k_win, k_bin, k_wout, k_bout = jax.random.split(key, 5)

    x = jax.random.normal(k_x, (B, N, D), dtype=jnp.float32)

    # Weights mimic trunc_normal_(std=0.02); small random biases exercise the
    # bias path (the module's constant_(0) init would leave it untested).
    in_proj_weight = 0.02 * jax.random.truncated_normal(
        k_win, -2.0, 2.0, (3 * D, D), dtype=jnp.float32)
    in_proj_bias = 0.01 * jax.random.normal(k_bin, (3 * D,), dtype=jnp.float32)
    out_proj_weight = 0.02 * jax.random.truncated_normal(
        k_wout, -2.0, 2.0, (D, D), dtype=jnp.float32)
    out_proj_bias = 0.01 * jax.random.normal(k_bout, (D,), dtype=jnp.float32)

    out = attention_pallas(x, in_proj_weight, in_proj_bias,
                           out_proj_weight, out_proj_bias, num_heads=H)
    out = jax.block_until_ready(out)

    ref = attention_reference(x, in_proj_weight, in_proj_bias,
                              out_proj_weight, out_proj_bias, num_heads=H)
    # Tolerance loosened slightly vs. exact f32: pl.reciprocal(approx=True)
    # introduces a small relative error in the softmax normalization.
    assert jnp.allclose(out, ref, atol=2e-3, rtol=2e-3), "mismatch vs reference"

    print("KERNEL_OK")
</pallas_src>

<mosaic_0001>
module attributes {stable_mosaic.version = 11 : i64} {
  func.func @_mha_kernel(%arg0: i32, %arg1: memref<1x8x32xf32, #tpu.memory_space<vmem>>, %arg2: memref<32x96xf32, #tpu.memory_space<vmem>>, %arg3: memref<1x96xf32, #tpu.memory_space<vmem>>, %arg4: memref<4x8x32xf32, #tpu.memory_space<vmem>>, %arg5: memref<1x32xf32, #tpu.memory_space<vmem>>, %arg6: memref<1x8x32xf32, #tpu.memory_space<vmem>>) attributes {dimension_semantics = [#tpu.dimension_semantics<parallel>], iteration_bounds = array<i64: 2>, scalar_prefetch = 0 : i64, scratch_operands = 0 : i64, tpu.core_type = #tpu.core_type<tc>, window_params = [{transform_indices = @transform_0, window_bounds = array<i64: 1, 8, 32>}, {pipeline_mode = #tpu.pipeline_mode<synchronous>, transform_indices = @transform_1, window_bounds = array<i64: 32, 96>}, {pipeline_mode = #tpu.pipeline_mode<synchronous>, transform_indices = @transform_2, window_bounds = array<i64: 1, 96>}, {pipeline_mode = #tpu.pipeline_mode<synchronous>, transform_indices = @transform_3, window_bounds = array<i64: 4, 8, 32>}, {pipeline_mode = #tpu.pipeline_mode<synchronous>, transform_indices = @transform_4, window_bounds = array<i64: 1, 32>}, {transform_indices = @transform_5, window_bounds = array<i64: 1, 8, 32>}]} {
    %c0 = arith.constant 0 : index
    %c0_0 = arith.constant 0 : index
    %c0_1 = arith.constant 0 : index
    %0 = vector.load %arg1[%c0, %c0_0, %c0_1] : memref<1x8x32xf32, #tpu.memory_space<vmem>>, vector<1x8x32xf32>
    %1 = vector.shape_cast %0 : vector<1x8x32xf32> to vector<8x32xf32>
    %c0_2 = arith.constant 0 : index
    %c0_3 = arith.constant 0 : index
    %2 = vector.load %arg2[%c0_2, %c0_3] : memref<32x96xf32, #tpu.memory_space<vmem>>, vector<32x96xf32>
    %cst = arith.constant dense<0.000000e+00> : vector<8x96xf32>
    %3 = tpu.matmul %1, %2, %cst {dimension_numbers = #tpu.dot_dimension_numbers<[1], [0], [0], [1], [0, 0, 1, 1], [], []>} : vector<8x32xf32>, vector<32x96xf32>, vector<8x96xf32> -> vector<8x96xf32>
    %c0_4 = arith.constant 0 : index
    %c0_5 = arith.constant 0 : index
    %4 = vector.load %arg3[%c0_4, %c0_5] : memref<1x96xf32, #tpu.memory_space<vmem>>, vector<1x96xf32>
    %5 = vector.broadcast %4 : vector<1x96xf32> to vector<8x96xf32>
    %6 = arith.addf %3, %5 : vector<8x96xf32>
    %7 = vector.extract_strided_slice %6 {offsets = [0, 0], sizes = [8, 32], strides = [1, 1]} : vector<8x96xf32> to vector<8x32xf32>
    %8 = vector.extract_strided_slice %6 {offsets = [0, 32], sizes = [8, 32], strides = [1, 1]} : vector<8x96xf32> to vector<8x32xf32>
    %9 = vector.extract_strided_slice %6 {offsets = [0, 64], sizes = [8, 32], strides = [1, 1]} : vector<8x96xf32> to vector<8x32xf32>
    %cst_6 = arith.constant 0.000000e+00 : f32
    %10 = vector.broadcast %cst_6 : f32 to vector<8x32xf32>
    %11 = vector.extract_strided_slice %7 {offsets = [0, 0], sizes = [8, 8], strides = [1, 1]} : vector<8x32xf32> to vector<8x8xf32>
    %12 = vector.extract_strided_slice %8 {offsets = [0, 0], sizes = [8, 8], strides = [1, 1]} : vector<8x32xf32> to vector<8x8xf32>
    %13 = vector.extract_strided_slice %9 {offsets = [0, 0], sizes = [8, 8], strides = [1, 1]} : vector<8x32xf32> to vector<8x8xf32>
    %cst_7 = arith.constant dense<0.000000e+00> : vector<8x8xf32>
    %14 = tpu.matmul %11, %12, %cst_7 {dimension_numbers = #tpu.dot_dimension_numbers<[1], [1], [0], [0], [0, 0, 1, 0], [], []>} : vector<8x8xf32>, vector<8x8xf32>, vector<8x8xf32> -> vector<8x8xf32>
    %cst_8 = arith.constant dense<0xFF800000> : vector<8xf32>
    %15 = vector.multi_reduction <maximumf>, %14, %cst_8 [1] : vector<8x8xf32> to vector<8xf32>
    %16 = vector.shape_cast %15 : vector<8xf32> to vector<8x1xf32>
    %17 = vector.broadcast %16 : vector<8x1xf32> to vector<8x8xf32>
    %18 = arith.subf %14, %17 : vector<8x8xf32>
    %19 = math.exp %18 : vector<8x8xf32>
    %cst_9 = arith.constant dense<0.000000e+00> : vector<8xf32>
    %20 = vector.multi_reduction <add>, %19, %cst_9 [1] : vector<8x8xf32> to vector<8xf32>
    %21 = vector.shape_cast %20 : vector<8xf32> to vector<8x1xf32>
    %22 = tpu.reciprocal %21 {approx = true} : vector<8x1xf32> -> vector<8x1xf32>
    %23 = vector.broadcast %22 : vector<8x1xf32> to vector<8x8xf32>
    %24 = arith.mulf %19, %23 : vector<8x8xf32>
    %cst_10 = arith.constant dense<0.000000e+00> : vector<8x8xf32>
    %25 = tpu.matmul %24, %13, %cst_10 {dimension_numbers = #tpu.dot_dimension_numbers<[1], [0], [0], [1], [0, 0, 1, 1], [], []>} : vector<8x8xf32>, vector<8x8xf32>, vector<8x8xf32> -> vector<8x8xf32>
    %c0_11 = arith.constant 0 : index
    %c0_12 = arith.constant 0 : index
    %c0_13 = arith.constant 0 : index
    %26 = vector.load %arg4[%c0_11, %c0_12, %c0_13] : memref<4x8x32xf32, #tpu.memory_space<vmem>>, vector<1x8x32xf32>
    %27 = vector.shape_cast %26 : vector<1x8x32xf32> to vector<8x32xf32>
    %cst_14 = arith.constant dense<0.000000e+00> : vector<8x32xf32>
    %28 = tpu.matmul %25, %27, %cst_14 {dimension_numbers = #tpu.dot_dimension_numbers<[1], [0], [0], [1], [0, 0, 1, 1], [], []>} : vector<8x8xf32>, vector<8x32xf32>, vector<8x32xf32> -> vector<8x32xf32>
    %29 = arith.addf %10, %28 : vector<8x32xf32>
    %30 = vector.extract_strided_slice %7 {offsets = [0, 8], sizes = [8, 8], strides = [1, 1]} : vector<8x32xf32> to vector<8x8xf32>
    %31 = vector.extract_strided_slice %8 {offsets = [0, 8], sizes = [8, 8], strides = [1, 1]} : vector<8x32xf32> to vector<8x8xf32>
    %32 = vector.extract_strided_slice %9 {offsets = [0, 8], sizes = [8, 8], strides = [1, 1]} : vector<8x32xf32> to vector<8x8xf32>
    %cst_15 = arith.constant dense<0.000000e+00> : vector<8x8xf32>
    %33 = tpu.matmul %30, %31, %cst_15 {dimension_numbers = #tpu.dot_dimension_numbers<[1], [1], [0], [0], [0, 0, 1, 0], [], []>} : vector<8x8xf32>, vector<8x8xf32>, vector<8x8xf32> -> vector<8x8xf32>
    %cst_16 = arith.constant dense<0xFF800000> : vector<8xf32>
    %34 = vector.multi_reduction <maximumf>, %33, %cst_16 [1] : vector<8x8xf32> to vector<8xf32>
    %35 = vector.shape_cast %34 : vector<8xf32> to vector<8x1xf32>
    %36 = vector.broadcast %35 : vector<8x1xf32> to vector<8x8xf32>
    %37 = arith.subf %33, %36 : vector<8x8xf32>
    %38 = math.exp %37 : vector<8x8xf32>
    %cst_17 = arith.constant dense<0.000000e+00> : vector<8xf32>
    %39 = vector.multi_reduction <add>, %38, %cst_17 [1] : vector<8x8xf32> to vector<8xf32>
    %40 = vector.shape_cast %39 : vector<8xf32> to vector<8x1xf32>
    %41 = tpu.reciprocal %40 {approx = true} : vector<8x1xf32> -> vector<8x1xf32>
    %42 = vector.broadcast %41 : vector<8x1xf32> to vector<8x8xf32>
    %43 = arith.mulf %38, %42 : vector<8x8xf32>
    %cst_18 = arith.constant dense<0.000000e+00> : vector<8x8xf32>
    %44 = tpu.matmul %43, %32, %cst_18 {dimension_numbers = #tpu.dot_dimension_numbers<[1], [0], [0], [1], [0, 0, 1, 1], [], []>} : vector<8x8xf32>, vector<8x8xf32>, vector<8x8xf32> -> vector<8x8xf32>
    %c1 = arith.constant 1 : index
    %c0_19 = arith.constant 0 : index
    %c0_20 = arith.constant 0 : index
    %45 = vector.load %arg4[%c1, %c0_19, %c0_20] : memref<4x8x32xf32, #tpu.memory_space<vmem>>, vector<1x8x32xf32>
    %46 = vector.shape_cast %45 : vector<1x8x32xf32> to vector<8x32xf32>
    %cst_21 = arith.constant dense<0.000000e+00> : vector<8x32xf32>
    %47 = tpu.matmul %44, %46, %cst_21 {dimension_numbers = #tpu.dot_dimension_numbers<[1], [0], [0], [1], [0, 0, 1, 1], [], []>} : vector<8x8xf32>, vector<8x32xf32>, vector<8x32xf32> -> vector<8x32xf32>
    %48 = arith.addf %29, %47 : vector<8x32xf32>
    %49 = vector.extract_strided_slice %7 {offsets = [0, 16], sizes = [8, 8], strides = [1, 1]} : vector<8x32xf32> to vector<8x8xf32>
    %50 = vector.extract_strided_slice %8 {offsets = [0, 16], sizes = [8, 8], strides = [1, 1]} : vector<8x32xf32> to vector<8x8xf32>
    %51 = vector.extract_strided_slice %9 {offsets = [0, 16], sizes = [8, 8], strides = [1, 1]} : vector<8x32xf32> to vector<8x8xf32>
    %cst_22 = arith.constant dense<0.000000e+00> : vector<8x8xf32>
    %52 = tpu.matmul %49, %50, %cst_22 {dimension_numbers = #tpu.dot_dimension_numbers<[1], [1], [0], [0], [0, 0, 1, 0], [], []>} : vector<8x8xf32>, vector<8x8xf32>, vector<8x8xf32> -> vector<8x8xf32>
    %cst_23 = arith.constant dense<0xFF800000> : vector<8xf32>
    %53 = vector.multi_reduction <maximumf>, %52, %cst_23 [1] : vector<8x8xf32> to vector<8xf32>
    %54 = vector.shape_cast %53 : vector<8xf32> to vector<8x1xf32>
    %55 = vector.broadcast %54 : vector<8x1xf32> to vector<8x8xf32>
    %56 = arith.subf %52, %55 : vector<8x8xf32>
    %57 = math.exp %56 : vector<8x8xf32>
    %cst_24 = arith.constant dense<0.000000e+00> : vector<8xf32>
    %58 = vector.multi_reduction <add>, %57, %cst_24 [1] : vector<8x8xf32> to vector<8xf32>
    %59 = vector.shape_cast %58 : vector<8xf32> to vector<8x1xf32>
    %60 = tpu.reciprocal %59 {approx = true} : vector<8x1xf32> -> vector<8x1xf32>
    %61 = vector.broadcast %60 : vector<8x1xf32> to vector<8x8xf32>
    %62 = arith.mulf %57, %61 : vector<8x8xf32>
    %cst_25 = arith.constant dense<0.000000e+00> : vector<8x8xf32>
    %63 = tpu.matmul %62, %51, %cst_25 {dimension_numbers = #tpu.dot_dimension_numbers<[1], [0], [0], [1], [0, 0, 1, 1], [], []>} : vector<8x8xf32>, vector<8x8xf32>, vector<8x8xf32> -> vector<8x8xf32>
    %c2 = arith.constant 2 : index
    %c0_26 = arith.constant 0 : index
    %c0_27 = arith.constant 0 : index
    %64 = vector.load %arg4[%c2, %c0_26, %c0_27] : memref<4x8x32xf32, #tpu.memory_space<vmem>>, vector<1x8x32xf32>
    %65 = vector.shape_cast %64 : vector<1x8x32xf32> to vector<8x32xf32>
    %cst_28 = arith.constant dense<0.000000e+00> : vector<8x32xf32>
    %66 = tpu.matmul %63, %65, %cst_28 {dimension_numbers = #tpu.dot_dimension_numbers<[1], [0], [0], [1], [0, 0, 1, 1], [], []>} : vector<8x8xf32>, vector<8x32xf32>, vector<8x32xf32> -> vector<8x32xf32>
    %67 = arith.addf %48, %66 : vector<8x32xf32>
    %68 = vector.extract_strided_slice %7 {offsets = [0, 24], sizes = [8, 8], strides = [1, 1]} : vector<8x32xf32> to vector<8x8xf32>
    %69 = vector.extract_strided_slice %8 {offsets = [0, 24], sizes = [8, 8], strides = [1, 1]} : vector<8x32xf32> to vector<8x8xf32>
    %70 = vector.extract_strided_slice %9 {offsets = [0, 24], sizes = [8, 8], strides = [1, 1]} : vector<8x32xf32> to vector<8x8xf32>
    %cst_29 = arith.constant dense<0.000000e+00> : vector<8x8xf32>
    %71 = tpu.matmul %68, %69, %cst_29 {dimension_numbers = #tpu.dot_dimension_numbers<[1], [1], [0], [0], [0, 0, 1, 0], [], []>} : vector<8x8xf32>, vector<8x8xf32>, vector<8x8xf32> -> vector<8x8xf32>
    %cst_30 = arith.constant dense<0xFF800000> : vector<8xf32>
    %72 = vector.multi_reduction <maximumf>, %71, %cst_30 [1] : vector<8x8xf32> to vector<8xf32>
    %73 = vector.shape_cast %72 : vector<8xf32> to vector<8x1xf32>
    %74 = vector.broadcast %73 : vector<8x1xf32> to vector<8x8xf32>
    %75 = arith.subf %71, %74 : vector<8x8xf32>
    %76 = math.exp %75 : vector<8x8xf32>
    %cst_31 = arith.constant dense<0.000000e+00> : vector<8xf32>
    %77 = vector.multi_reduction <add>, %76, %cst_31 [1] : vector<8x8xf32> to vector<8xf32>
    %78 = vector.shape_cast %77 : vector<8xf32> to vector<8x1xf32>
    %79 = tpu.reciprocal %78 {approx = true} : vector<8x1xf32> -> vector<8x1xf32>
    %80 = vector.broadcast %79 : vector<8x1xf32> to vector<8x8xf32>
    %81 = arith.mulf %76, %80 : vector<8x8xf32>
    %cst_32 = arith.constant dense<0.000000e+00> : vector<8x8xf32>
    %82 = tpu.matmul %81, %70, %cst_32 {dimension_numbers = #tpu.dot_dimension_numbers<[1], [0], [0], [1], [0, 0, 1, 1], [], []>} : vector<8x8xf32>, vector<8x8xf32>, vector<8x8xf32> -> vector<8x8xf32>
    %c3 = arith.constant 3 : index
    %c0_33 = arith.constant 0 : index
    %c0_34 = arith.constant 0 : index
    %83 = vector.load %arg4[%c3, %c0_33, %c0_34] : memref<4x8x32xf32, #tpu.memory_space<vmem>>, vector<1x8x32xf32>
    %84 = vector.shape_cast %83 : vector<1x8x32xf32> to vector<8x32xf32>
    %cst_35 = arith.constant dense<0.000000e+00> : vector<8x32xf32>
    %85 = tpu.matmul %82, %84, %cst_35 {dimension_numbers = #tpu.dot_dimension_numbers<[1], [0], [0], [1], [0, 0, 1, 1], [], []>} : vector<8x8xf32>, vector<8x32xf32>, vector<8x32xf32> -> vector<8x32xf32>
    %86 = arith.addf %67, %85 : vector<8x32xf32>
    %c0_36 = arith.constant 0 : index
    %c0_37 = arith.constant 0 : index
    %87 = vector.load %arg5[%c0_36, %c0_37] : memref<1x32xf32, #tpu.memory_space<vmem>>, vector<1x32xf32>
    %88 = vector.broadcast %87 : vector<1x32xf32> to vector<8x32xf32>
    %89 = arith.addf %86, %88 : vector<8x32xf32>
    %c0_38 = arith.constant 0 : index
    %c0_39 = arith.constant 0 : index
    %c0_40 = arith.constant 0 : index
    %90 = vector.load %arg6[%c0_38, %c0_39, %c0_40] : memref<1x8x32xf32, #tpu.memory_space<vmem>>, vector<1x8x32xf32>
    %91 = vector.shape_cast %90 : vector<1x8x32xf32> to vector<8x32xf32>
    %92 = vector.shape_cast %89 : vector<8x32xf32> to vector<1x8x32xf32>
    tpu.vector_store %arg6[%c0_38, %c0_39, %c0_40], %92 {strides = array<i32>} : memref<1x8x32xf32, #tpu.memory_space<vmem>>, vector<1x8x32xf32>,
    return
  }
  func.func @transform_0(%arg0: i32) -> (i32, i32, i32) {
    %c0_i32 = arith.constant 0 : i32
    %c0_i32_0 = arith.constant 0 : i32
    %c0_i32_1 = arith.constant 0 : i32
    return %arg0, %c0_i32, %c0_i32_0 : i32, i32, i32
  }
  func.func @transform_1(%arg0: i32) -> (i32, i32) {
    %c0_i32 = arith.constant 0 : i32
    %c0_i32_0 = arith.constant 0 : i32
    %c0_i32_1 = arith.constant 0 : i32
    return %c0_i32, %c0_i32_0 : i32, i32
  }
  func.func @transform_2(%arg0: i32) -> (i32, i32) {
    %c0_i32 = arith.constant 0 : i32
    %c0_i32_0 = arith.constant 0 : i32
    %c0_i32_1 = arith.constant 0 : i32
    return %c0_i32, %c0_i32_0 : i32, i32
  }
  func.func @transform_3(%arg0: i32) -> (i32, i32, i32) {
    %c0_i32 = arith.constant 0 : i32
    %c0_i32_0 = arith.constant 0 : i32
    %c0_i32_1 = arith.constant 0 : i32
    %c0_i32_2 = arith.constant 0 : i32
    return %c0_i32, %c0_i32_0, %c0_i32_1 : i32, i32, i32
  }
  func.func @transform_4(%arg0: i32) -> (i32, i32) {
    %c0_i32 = arith.constant 0 : i32
    %c0_i32_0 = arith.constant 0 : i32
    %c0_i32_1 = arith.constant 0 : i32
    return %c0_i32, %c0_i32_0 : i32, i32
  }
  func.func @transform_5(%arg0: i32) -> (i32, i32, i32) {
    %c0_i32 = arith.constant 0 : i32
    %c0_i32_0 = arith.constant 0 : i32
    %c0_i32_1 = arith.constant 0 : i32
    return %arg0, %c0_i32, %c0_i32_0 : i32, i32, i32
  }
}

</mosaic_0001>

<llo_original>
// kernel: tpu_custom_call.1
$region0: #{tpu_custom_call.1}
  #allocation0 [shape = 'u32[]', space=smem, size = 0x4, offset = 0x4, fixed_abs, tag = 'smem constant byte address 0x4 - core index']
  #allocation1 [shape = 'u32[144,128]{1,0:T(1,128)}', space=vmem, size = 0x12000, scoped, tag = 'internal scratch']
  %s0 = inlined_call_operand.hbm [shape: f32[2,8,32], index: 0, kind: input, shape index: {}]
  %s1 = inlined_call_operand.hbm [shape: f32[32,96], index: 1, kind: input, shape index: {}]
  %s2 = inlined_call_operand.vmem [shape: f32[1,96], index: 2, kind: input, shape index: {}]
  %s3 = inlined_call_operand.hbm [shape: f32[4,8,32], index: 3, kind: input, shape index: {}]
  %s4 = inlined_call_operand.vmem [shape: f32[1,32], index: 4, kind: input, shape index: {}]
  %s5 = inlined_call_operand.hbm [shape: f32[2,8,32], index: 5, kind: output, shape index: {}]
  %s6 = sld [smem:[#allocation0]]
  $region65: #{tpu_custom_call.1} parent=0
    _
  %s8 = ssub.s32 1, %s6
  %s9 = scalar_select 0, %s8, %s6
  $region1: #{tpu_custom_call.1} parent=0
    #allocation2 [shape = 'u8[8192]{0}', space=vmem, size = 0x2000, scoped, tag = 'input window, operand 0']
    #allocation3 [shape = 's32[2]{0}', space=sflag, size = 0x8, scoped, tag = 'scoped memory for tpu_custom_call.1']
    #allocation4 [shape = 's32[2]{0}', space=sflag, size = 0x8, scoped, tag = 'scoped memory for tpu_custom_call.1']
    #allocation5 [shape = 'u8[16384]{0}', space=vmem, size = 0x4000, scoped, tag = 'input window, operand 1, single buffered']
    #allocation6 [shape = 's32[1]{0}', space=sflag, size = 0x4, scoped, tag = 'scoped memory for tpu_custom_call.1']
    #allocation7 [shape = 'u8[16384]{0}', space=vmem, size = 0x4000, scoped, tag = 'input window, operand 3, single buffered']
    #allocation8 [shape = 'u8[8192]{0}', space=vmem, size = 0x2000, scoped, tag = 'output window, operand 0']
    %10 = vsyncpa [#allocation3], 0
    %s11 = scalar_lea.sflag [#allocation3], 1
    %12 = vsyncpa %s11, 0
    %13 = vsyncpa [#allocation6], 0
    %14 = vsyncpa [#allocation4], 0
    %s15 = scalar_lea.sflag [#allocation4], 1
    %16 = vsyncpa %s15, 0
    loop: start=0, step=1, limit=4
    $region2: #{tpu_custom_call.1} parent=1 // loop_pre_header
      _
    $region3: #{tpu_custom_call.1} parent=1 // loop_header
      %s18 = sphi 0, %s22
      %p19 = scmp.ge.s32.totalorder %s18, 4
      %s28 = sphi 0, %s30
      %s31 = sphi 0, %s28
      %s32 = sphi 0, %s31
      %s48 = sphi 0, %s32
      %s52 = sphi 0, %s52
      %s54 = sphi 0, %s52
      %s55 = sphi 0, %s54
      %s69 = sphi 0, %s55
      %s73 = sphi 0, %s73
      %s75 = sphi 0, %s73
      %s76 = sphi 0, %s75
      %s90 = sphi 0, %s76
      %s94 = sphi 0, %s94
      %s96 = sphi 0, %s94
      %s97 = sphi 0, %s96
      %s111 = sphi 0, %s97
      %s115 = sphi 0, %s115
      %s117 = sphi 0, %s115
      %s118 = sphi 0, %s117
      %s132 = sphi 0, %s118
      %s138 = sphi 0, %s140
      %s141 = sphi 0, %s138
      %s142 = sphi 0, %s141
      %s158 = sphi 0, %s142
    $region4: #{tpu_custom_call.1} parent=1 // loop_header_branch
      %21 = sbr.rel (%p19) target = $region8
    $region5: #{tpu_custom_call.1} parent=1 // loop_body
      %s23 = ssub.s32 %s18, 1
      %s24 = ssub.s32 %s18, 2
      %s25 = sadd.s32 %s18, 1
      %s26 = ssub.s32 %s18, %s25
      %p27 = scmp.eq.s32.totalorder %s26, 0
      %s29 = sadd.s32 %s28, 1
      %s30 = scalar_select %p27, %s28, %s29
      %p33 = pneg %p27
      %p34 = scmp.eq.s32.totalorder %s18, 1
      %p35 = por %p33, %p34
      %p36 = scmp.ne.s32.totalorder %s28, %s31
      %p37 = scmp.eq.s32.totalorder %s18, 0
      %p38 = por %p36, %p37
      %p39 = scmp.ne.s32.totalorder %s28, %s31
      %p40 = scmp.eq.s32.totalorder %s23, 1
      %p41 = por %p39, %p40
      %p42 = scmp.ne.s32.totalorder %s31, %s32
      %p43 = scmp.eq.s32.totalorder %s23, 0
      %p44 = por %p42, %p43
      %p45 = scmp.ne.s32.totalorder %s31, %s32
      %p46 = scmp.eq.s32.totalorder %s24, 1
      %p47 = por %p45, %p46
      %p49 = scmp.ne.s32.totalorder %s32, %s48
      %p50 = scmp.eq.s32.totalorder %s24, 0
      %p51 = por %p49, %p50
      %s53 = sadd.s32 %s52, 1
      %p56 = scmp.eq.s32.totalorder %s18, 1
      %p57 = scmp.ne.s32.totalorder %s52, %s54
      %p58 = scmp.eq.s32.totalorder %s18, 0
      %p59 = por %p57, %p58
      %p60 = scmp.ne.s32.totalorder %s52, %s54
      %p61 = scmp.eq.s32.totalorder %s23, 1
      %p62 = por %p60, %p61
      %p63 = scmp.ne.s32.totalorder %s54, %s55
      %p64 = scmp.eq.s32.totalorder %s23, 0
      %p65 = por %p63, %p64
      %p66 = scmp.ne.s32.totalorder %s54, %s55
      %p67 = scmp.eq.s32.totalorder %s24, 1
      %p68 = por %p66, %p67
      %p70 = scmp.ne.s32.totalorder %s55, %s69
      %p71 = scmp.eq.s32.totalorder %s24, 0
      %p72 = por %p70, %p71
      %s74 = sadd.s32 %s73, 1
      %p77 = scmp.eq.s32.totalorder %s18, 1
      %p78 = scmp.ne.s32.totalorder %s73, %s75
      %p79 = scmp.eq.s32.totalorder %s18, 0
      %p80 = por %p78, %p79
      %p81 = scmp.ne.s32.totalorder %s73, %s75
      %p82 = scmp.eq.s32.totalorder %s23, 1
      %p83 = por %p81, %p82
      %p84 = scmp.ne.s32.totalorder %s75, %s76
      %p85 = scmp.eq.s32.totalorder %s23, 0
      %p86 = por %p84, %p85
      %p87 = scmp.ne.s32.totalorder %s75, %s76
      %p88 = scmp.eq.s32.totalorder %s24, 1
      %p89 = por %p87, %p88
      %p91 = scmp.ne.s32.totalorder %s76, %s90
      %p92 = scmp.eq.s32.totalorder %s24, 0
      %p93 = por %p91, %p92
      %s95 = sadd.s32 %s94, 1
      %p98 = scmp.eq.s32.totalorder %s18, 1
      %p99 = scmp.ne.s32.totalorder %s94, %s96
      %p100 = scmp.eq.s32.totalorder %s18, 0
      %p101 = por %p99, %p100
      %p102 = scmp.ne.s32.totalorder %s94, %s96
      %p103 = scmp.eq.s32.totalorder %s23, 1
      %p104 = por %p102, %p103
      %p105 = scmp.ne.s32.totalorder %s96, %s97
      %p106 = scmp.eq.s32.totalorder %s23, 0
      %p107 = por %p105, %p106
      %p108 = scmp.ne.s32.totalorder %s96, %s97
      %p109 = scmp.eq.s32.totalorder %s24, 1
      %p110 = por %p108, %p109
      %p112 = scmp.ne.s32.totalorder %s97, %s111
      %p113 = scmp.eq.s32.totalorder %s24, 0
      %p114 = por %p112, %p113
      %s116 = sadd.s32 %s115, 1
      %p119 = scmp.eq.s32.totalorder %s18, 1
      %p120 = scmp.ne.s32.totalorder %s115, %s117
      %p121 = scmp.eq.s32.totalorder %s18, 0
      %p122 = por %p120, %p121
      %p123 = scmp.ne.s32.totalorder %s115, %s117
      %p124 = scmp.eq.s32.totalorder %s23, 1
      %p125 = por %p123, %p124
      %p126 = scmp.ne.s32.totalorder %s117, %s118
      %p127 = scmp.eq.s32.totalorder %s23, 0
      %p128 = por %p126, %p127
      %p129 = scmp.ne.s32.totalorder %s117, %s118
      %p130 = scmp.eq.s32.totalorder %s24, 1
      %p131 = por %p129, %p130
      %p133 = scmp.ne.s32.totalorder %s118, %s132
      %p134 = scmp.eq.s32.totalorder %s24, 0
      %p135 = por %p133, %p134
      %s136 = ssub.s32 %s18, %s25
      %p137 = scmp.eq.s32.totalorder %s136, 0
      %s139 = sadd.s32 %s138, 1
      %s140 = scalar_select %p137, %s138, %s139
      %p143 = pneg %p137
      %p144 = scmp.eq.s32.totalorder %s18, 1
      %p145 = por %p143, %p144
      %p146 = scmp.ne.s32.totalorder %s138, %s141
      %p147 = scmp.eq.s32.totalorder %s18, 0
      %p148 = por %p146, %p147
      %p149 = scmp.ne.s32.totalorder %s138, %s141
      %p150 = scmp.eq.s32.totalorder %s23, 1
      %p151 = por %p149, %p150
      %p152 = scmp.ne.s32.totalorder %s141, %s142
      %p153 = scmp.eq.s32.totalorder %s23, 0
      %p154 = por %p152, %p153
      %p155 = scmp.ne.s32.totalorder %s141, %s142
      %p156 = scmp.eq.s32.totalorder %s24, 1
      %p157 = por %p155, %p156
      %p159 = scmp.ne.s32.totalorder %s142, %s158
      %p160 = scmp.eq.s32.totalorder %s24, 0
      %p161 = por %p159, %p160
      %p162 = scmp.le.s32.totalorder 1, %s18
      %p163 = scmp.lt.s32.totalorder %s18, 3
      %p164 = pnand %p162, %p163
      %p165 = pneg %p164
      // Predicated region
      $region9: #{tpu_custom_call.1} parent=5 // pred_check
        _
      $region10: #{tpu_custom_call.1} parent=5 // pred_check_branch
        %167 = sbr.rel (%p164) target = $region12
      $region11: #{tpu_custom_call.1} parent=5 // pred_region
        %s168 = ssub.s32 %s18, 1
        // Predicated region
        $region13: #{tpu_custom_call.1} parent=11 // pred_check
          %p169 = pneg %p65
        $region14: #{tpu_custom_call.1} parent=11 // pred_check_branch
          %171 = sbr.rel (%p169) target = $region16
        $region15: #{tpu_custom_call.1} parent=11 // pred_region
          %s173 = ssub.s32 512, 512
          %174 = vsyncadd [#allocation6], %s173
          %s175 = sshll.u32 [#allocation5], 4
          %s176 = int_to_ptr.vmem [resolvable:$true] %s175
          %181 = dma.hbm_to_vmem [thread:$0]  %s1, 512, %s176, [#allocation6], 128, 128, 8
        $region16: #{tpu_custom_call.1} parent=11 // pred_fallthru
          _
        // Predicated region
        $region17: #{tpu_custom_call.1} parent=11 // pred_check
          %p182 = pneg %p86
        $region18: #{tpu_custom_call.1} parent=11 // pred_check_branch
          %184 = sbr.rel (%p182) target = $region20
        $region19: #{tpu_custom_call.1} parent=11 // pred_region
          _
        $region20: #{tpu_custom_call.1} parent=11 // pred_fallthru
          _
        // Predicated region
        $region21: #{tpu_custom_call.1} parent=11 // pred_check
          %p185 = pneg %p107
        $region22: #{tpu_custom_call.1} parent=11 // pred_check_branch
          %187 = sbr.rel (%p185) target = $region24
        $region23: #{tpu_custom_call.1} parent=11 // pred_region
          %s189 = ssub.s32 512, 512
          %190 = vsyncadd [#allocation6], %s189
          %s191 = sshll.u32 [#allocation7], 4
          %s192 = int_to_ptr.vmem [resolvable:$true] %s191
          %197 = dma.hbm_to_vmem [thread:$0]  %s3, 512, %s192, [#allocation6], 128, 128, 8
        $region24: #{tpu_custom_call.1} parent=11 // pred_fallthru
          _
        // Predicated region
        $region25: #{tpu_custom_call.1} parent=11 // pred_check
          %p198 = pneg %p128
        $region26: #{tpu_custom_call.1} parent=11 // pred_check_branch
          %200 = sbr.rel (%p198) target = $region28
        $region27: #{tpu_custom_call.1} parent=11 // pred_region
          _
        $region28: #{tpu_custom_call.1} parent=11 // pred_fallthru
          _
      $region12: #{tpu_custom_call.1} parent=5 // pred_fallthru
        _
      %p201 = scmp.lt.s32.totalorder %s18, 2
      // Predicated region
      $region29: #{tpu_custom_call.1} parent=5 // pred_check
        %p202 = pneg %p201
      $region30: #{tpu_custom_call.1} parent=5 // pred_check_branch
        %204 = sbr.rel (%p202) target = $region32
      $region31: #{tpu_custom_call.1} parent=5 // pred_region
        // Predicated region
        $region33: #{tpu_custom_call.1} parent=31 // pred_check
          %p205 = pneg %p38
        $region34: #{tpu_custom_call.1} parent=31 // pred_check_branch
          %207 = sbr.rel (%p205) target = $region36
        $region35: #{tpu_custom_call.1} parent=31 // pred_region
          %s208 = sand.u32 %s28, 1
          %s209 = scalar_lea.sflag [#allocation3], %s208
          %s210 = sand.u32 %s28, 1
          %s211 = smul.addr %s210, 8
          %s212 = scalar_lea.vmem [#allocation2], %s211
          %s214 = ssub.s32 128, 128
          %215 = vsyncadd %s209, %s214
          %s216 = smul.addr %s18, 128
          %s217 = scalar_lea.hbm %s0, %s216
          %s219 = sshll.u32 %s212, 4
          %s220 = int_to_ptr.vmem [resolvable:$true] %s219
          %222 = dma.hbm_to_vmem [thread:$0]  %s217, 128, %s220, %s209
        $region36: #{tpu_custom_call.1} parent=31 // pred_fallthru
          _
      $region32: #{tpu_custom_call.1} parent=5 // pred_fallthru
        _
      %p223 = scmp.le.s32.totalorder 1, %s18
      %p224 = scmp.lt.s32.totalorder %s18, 3
      %p225 = pnand %p223, %p224
      %p226 = pneg %p225
      // Predicated region
      $region37: #{tpu_custom_call.1} parent=5 // pred_check
        _
      $region38: #{tpu_custom_call.1} parent=5 // pred_check_branch
        %228 = sbr.rel (%p225) target = $region40
      $region39: #{tpu_custom_call.1} parent=5 // pred_region
        %s229 = ssub.s32 %s18, 1
        %s230 = sand.u32 %s31, 1
        %s231 = scalar_lea.sflag [#allocation3], %s230
        %s232 = sand.u32 %s31, 1
        %s233 = smul.addr %s232, 8
        %s234 = scalar_lea.vmem [#allocation2], %s233
        // Predicated region
        $region41: #{tpu_custom_call.1} parent=39 // pred_check
          %p235 = pneg %p44
        $region42: #{tpu_custom_call.1} parent=39 // pred_check_branch
          %237 = sbr.rel (%p235) target = $region44
        $region43: #{tpu_custom_call.1} parent=39 // pred_region
          %238 = dma.done %s231, 128
        $region44: #{tpu_custom_call.1} parent=39 // pred_fallthru
          _
        // Predicated region
        $region45: #{tpu_custom_call.1} parent=39 // pred_check
          %p239 = pneg %p65
        $region46: #{tpu_custom_call.1} parent=39 // pred_check_branch
          %241 = sbr.rel (%p239) target = $region48
        $region47: #{tpu_custom_call.1} parent=39 // pred_region
          %242 = dma.done [#allocation6], 512
        $region48: #{tpu_custom_call.1} parent=39 // pred_fallthru
          _
        // Predicated region
        $region49: #{tpu_custom_call.1} parent=39 // pred_check
          %p243 = pneg %p107
        $region50: #{tpu_custom_call.1} parent=39 // pred_check_branch
          %245 = sbr.rel (%p243) target = $region52
        $region51: #{tpu_custom_call.1} parent=39 // pred_region
          %246 = dma.done [#allocation6], 512
        $region52: #{tpu_custom_call.1} parent=39 // pred_fallthru
          _
        %s247 = sand.u32 %s31, 1
        %s248 = scalar_lea.sflag [#allocation3], %s247
        %s249 = sand.u32 %s31, 1
        %s250 = smul.addr %s249, 8
        %s251 = scalar_lea.vmem [#allocation2], %s250
        %p252 = pneg %p44
        %p253 = pneg %p41
        %p254 = pneg %p65
        %p255 = pneg %p62
        %p256 = pneg %p86
        %p257 = pneg %p83
        %p258 = pneg %p107
        %p259 = pneg %p104
        %p260 = pneg %p128
        %p261 = pneg %p125
        %p262 = pneg %p154
        %p263 = pneg %p151
        %s264 = sand.u32 %s141, 1
        %s265 = scalar_lea.sflag [#allocation4], %s264
        %s266 = sand.u32 %s141, 1
        %s267 = smul.addr %s266, 8
        %s268 = scalar_lea.vmem [#allocation8], %s267
        %v269 = vld [vmem:[%s234] sm:$0xff]
        %v270 = vld [vmem:[#allocation5] sm:$0xff]
        %v271 = vld [vmem:[#allocation5 + $0x8] sm:$0xff]
        %v272 = vld [vmem:[#allocation5 + $0x10] sm:$0xff]
        %v273 = vld [vmem:[#allocation5 + $0x18] sm:$0xff]
        %v274 = vld [vmem:[%s2] sm:$0x1]
        %v276 = vlaneseq
        %v277 = vshrl.u32 %v276, 7
        %v278 = vsub.s32 0, %v277
        %v279 = vrot.slane %v274, %v278
        %vm281 = vcmask 261120
        %v283 = vsel %vm281, %v269, 0
        %285 = vmatprep.subr.mxu0 0.0
        %286 = vmatpush1.msra.mxu0 %v270
        %287 = vmatprep.subr.mxu0 0.0
        %288 = vmatpush1.msra.mxu0 %v271
        %289 = vmatprep.subr.mxu0 0.0
        %290 = vmatpush1.msra.mxu0 %v272
        %291 = vmatprep.subr.mxu0 0.0
        %292 = vmatpush1.msra.mxu0 %v273
        %293 = vmatprep.subr.mxu0 0.0
        %294 = vmatpush1.msra.mxu0 0.0
        %295 = vmatprep.subr.mxu0 0.0
        %296 = vmatpush1.msra.mxu0 0.0
        %297 = vmatprep.subr.mxu0 0.0
        %298 = vmatpush1.msra.mxu0 0.0
        %299 = vmatprep.subr.mxu0 0.0
        %300 = vmatpush1.msra.mxu0 0.0
        %301 = vmatprep.subr.mxu0 0.0
        %302 = vmatpush1.msra.mxu0 0.0
        %303 = vmatprep.subr.mxu0 0.0
        %304 = vmatpush1.msra.mxu0 0.0
        %305 = vmatprep.subr.mxu0 0.0
        %306 = vmatpush1.msra.mxu0 0.0
        %307 = vmatprep.subr.mxu0 0.0
        %308 = vmatpush1.msra.mxu0 0.0
        %309 = vmatprep.subr.mxu0 0.0
        %310 = vmatpush1.msra.mxu0 0.0
        %311 = vmatprep.subr.mxu0 0.0
        %312 = vmatpush1.msra.mxu0 0.0
        %313 = vmatprep.subr.mxu0 0.0
        %314 = vmatpush1.msra.mxu0 0.0
        %315 = vmatprep.subr.mxu0 0.0
        %316 = vmatpush1.msra.mxu0 0.0
        %317 = vmatprep.subr.mxu0 0.0
        %318 = vmatpush1.msra.mxu0 0.0
        %319 = vmatprep.subr.mxu0 0.0
        %320 = vmatpush1.msra.mxu0 0.0
        %321 = vmatprep.subr.mxu0 0.0
        %322 = vmatpush1.msra.mxu0 0.0
        %323 = vmatprep.subr.mxu0 0.0
        %324 = vmatpush1.msra.mxu0 0.0
        %325 = vmatprep.subr.mxu0 0.0
        %326 = vmatpush1.msra.mxu0 0.0
        %327 = vmatprep.subr.mxu0 0.0
        %328 = vmatpush1.msra.mxu0 0.0
        %329 = vmatprep.subr.mxu0 0.0
        %330 = vmatpush1.msra.mxu0 0.0
        %331 = vmatprep.subr.mxu0 0.0
        %332 = vmatpush1.msra.mxu0 0.0
        %333 = vmatprep.subr.mxu0 0.0
        %334 = vmatpush1.msra.mxu0 0.0
        %335 = vmatprep.subr.mxu0 0.0
        %336 = vmatpush1.msra.mxu0 0.0
        %337 = vmatprep.subr.mxu0 0.0
        %338 = vmatpush1.msra.mxu0 0.0
        %339 = vmatprep.subr.mxu0 0.0
        %340 = vmatpush1.msra.mxu0 0.0
        %341 = vmatprep.subr.mxu0 0.0
        %342 = vmatpush1.msra.mxu0 0.0
        %343 = vmatprep.subr.mxu0 0.0
        %344 = vmatpush1.msra.mxu0 0.0
        %345 = vmatprep.subr.mxu0 0.0
        %346 = vmatpush1.msra.mxu0 0.0
        %347 = vmatprep.subr.mxu0 0.0
        %348 = vmatpush1.msra.mxu0 0.0
        %349 = vmatprep.mubr.f32.mxu0 0.0
        %350 = vmatmul.mubr.f32.gmra.mrb[0].mxu0 %v283
        %v351 = vpop.f32.mrb[0].mxu0
        %v352 = vadd.f32 %v279, %v351
        %v353 = vpop.f32.mrb[0].mxu0
        %354 = vdwg.mxu0
        %356 = vrot.lane.b32.xlu0 %v352, 96
        %v357 = vpop.permute.xlu0 %356
        %vm358 = vcmask 64512
        %v359 = vsel %vm358, %v352, 0
        %v361 = vsel %vm358, %v357, 0
        %363 = vmatprep.subr.mxu0 0.0
        %364 = vmatpush1.xpose.msra.mxu0 %v361
        %365 = vmatprep.subr.mxu0 0.0
        %366 = vmatpush1.xpose.msra.mxu0 0.0
        %367 = vmatprep.subr.mxu0 0.0
        %368 = vmatpush1.xpose.msra.mxu0 0.0
        %369 = vmatprep.subr.mxu0 0.0
        %370 = vmatpush1.xpose.msra.mxu0 0.0
        %371 = vmatprep.subr.mxu0 0.0
        %372 = vmatpush1.xpose.msra.mxu0 0.0
        %373 = vmatprep.subr.mxu0 0.0
        %374 = vmatpush1.xpose.msra.mxu0 0.0
        %375 = vmatprep.subr.mxu0 0.0
        %376 = vmatpush1.xpose.msra.mxu0 0.0
        %377 = vmatprep.subr.mxu0 0.0
        %378 = vmatpush1.xpose.msra.mxu0 0.0
        %379 = vmatprep.subr.mxu0 0.0
        %380 = vmatpush1.xpose.msra.mxu0 0.0
        %381 = vmatprep.subr.mxu0 0.0
        %382 = vmatpush1.xpose.msra.mxu0 0.0
        %383 = vmatprep.subr.mxu0 0.0
        %384 = vmatpush1.xpose.msra.mxu0 0.0
        %385 = vmatprep.subr.mxu0 0.0
        %386 = vmatpush1.xpose.msra.mxu0 0.0
        %387 = vmatprep.subr.mxu0 0.0
        %388 = vmatpush1.xpose.msra.mxu0 0.0
        %389 = vmatprep.subr.mxu0 0.0
        %390 = vmatpush1.xpose.msra.mxu0 0.0
        %391 = vmatprep.subr.mxu0 0.0
        %392 = vmatpush1.xpose.msra.mxu0 0.0
        %393 = vmatprep.subr.mxu0 0.0
        %394 = vmatpush1.xpose.msra.mxu0 0.0
        %395 = vmatprep.subr.mxu0 0.0
        %396 = vmatpush1.xpose.msra.mxu0 0.0
        %397 = vmatprep.subr.mxu0 0.0
        %398 = vmatpush1.xpose.msra.mxu0 0.0
        %399 = vmatprep.subr.mxu0 0.0
        %400 = vmatpush1.xpose.msra.mxu0 0.0
        %401 = vmatprep.subr.mxu0 0.0
        %402 = vmatpush1.xpose.msra.mxu0 0.0
        %403 = vmatprep.subr.mxu0 0.0
        %404 = vmatpush1.xpose.msra.mxu0 0.0
        %405 = vmatprep.subr.mxu0 0.0
        %406 = vmatpush1.xpose.msra.mxu0 0.0
        %407 = vmatprep.subr.mxu0 0.0
        %408 = vmatpush1.xpose.msra.mxu0 0.0
        %409 = vmatprep.subr.mxu0 0.0
        %410 = vmatpush1.xpose.msra.mxu0 0.0
        %411 = vmatprep.subr.mxu0 0.0
        %412 = vmatpush1.xpose.msra.mxu0 0.0
        %413 = vmatprep.subr.mxu0 0.0
        %414 = vmatpush1.xpose.msra.mxu0 0.0
        %415 = vmatprep.subr.mxu0 0.0
        %416 = vmatpush1.xpose.msra.mxu0 0.0
        %417 = vmatprep.subr.mxu0 0.0
        %418 = vmatpush1.xpose.msra.mxu0 0.0
        %419 = vmatprep.subr.mxu0 0.0
        %420 = vmatpush1.xpose.msra.mxu0 0.0
        %421 = vmatprep.subr.mxu0 0.0
        %422 = vmatpush1.xpose.msra.mxu0 0.0
        %423 = vmatprep.subr.mxu0 0.0
        %424 = vmatpush1.xpose.msra.mxu0 0.0
        %425 = vmatprep.subr.mxu0 0.0
        %426 = vmatpush1.xpose.msra.mxu0 0.0
        %427 = vmatprep.mubr.f32.mxu0 0.0
        %428 = vmatmul.mubr.f32.gmra.mrb[0].mxu0 %v359
        %v429 = vpop.f32.mrb[0].mxu0
        %v430 = vadd.f32 0.0, %v429
        %v431 = vpop.f32.mrb[0].mxu0
        %432 = vdwg.mxu0
        %v433 = vsel %vm358, %v430, -inf
        %434 = vmax.xlane.f32.xlu0 %v433
        %v435 = vpop.xlane.xlu0 %434
        %v436 = vsub.f32 %v430, %v435
        %v437 = vmul.f32 %v436, 1.442695
        %v438 = vpow.pop %v437
        %v439 = vsel %vm358, %v438, 0.0
        %440 = vadd.xlane.f32.xlu0 %v439
        %v441 = vpop.xlane.xlu0 %440
        %v442 = vrcp.pop %v441
        %v443 = vmul.f32 %v438, %v442
        %444 = vrot.lane.b32.xlu0 %v352, 64
        %v445 = vpop.permute.xlu0 %444
        %v448 = vsel %vm358, %v443, 0
        %450 = vmatprep.subr.mxu0 0.0
        %451 = vmatpush1.msra.mxu0 %v445
        %452 = vmatprep.subr.mxu0 0.0
        %453 = vmatpush1.msra.mxu0 0.0
        %454 = vmatprep.subr.mxu0 0.0
        %455 = vmatpush1.msra.mxu0 0.0
        %456 = vmatprep.subr.mxu0 0.0
        %457 = vmatpush1.msra.mxu0 0.0
        %458 = vmatprep.subr.mxu0 0.0
        %459 = vmatpush1.msra.mxu0 0.0
        %460 = vmatprep.subr.mxu0 0.0
        %461 = vmatpush1.msra.mxu0 0.0
        %462 = vmatprep.subr.mxu0 0.0
        %463 = vmatpush1.msra.mxu0 0.0
        %464 = vmatprep.subr.mxu0 0.0
        %465 = vmatpush1.msra.mxu0 0.0
        %466 = vmatprep.subr.mxu0 0.0
        %467 = vmatpush1.msra.mxu0 0.0
        %468 = vmatprep.subr.mxu0 0.0
        %469 = vmatpush1.msra.mxu0 0.0
        %470 = vmatprep.subr.mxu0 0.0
        %471 = vmatpush1.msra.mxu0 0.0
        %472 = vmatprep.subr.mxu0 0.0
        %473 = vmatpush1.msra.mxu0 0.0
        %474 = vmatprep.subr.mxu0 0.0
        %475 = vmatpush1.msra.mxu0 0.0
        %476 = vmatprep.subr.mxu0 0.0
        %477 = vmatpush1.msra.mxu0 0.0
        %478 = vmatprep.subr.mxu0 0.0
        %479 = vmatpush1.msra.mxu0 0.0
        %480 = vmatprep.subr.mxu0 0.0
        %481 = vmatpush1.msra.mxu0 0.0
        %482 = vmatprep.subr.mxu0 0.0
        %483 = vmatpush1.msra.mxu0 0.0
        %484 = vmatprep.subr.mxu0 0.0
        %485 = vmatpush1.msra.mxu0 0.0
        %486 = vmatprep.subr.mxu0 0.0
        %487 = vmatpush1.msra.mxu0 0.0
        %488 = vmatprep.subr.mxu0 0.0
        %489 = vmatpush1.msra.mxu0 0.0
        %490 = vmatprep.subr.mxu0 0.0
        %491 = vmatpush1.msra.mxu0 0.0
        %492 = vmatprep.subr.mxu0 0.0
        %493 = vmatpush1.msra.mxu0 0.0
        %494 = vmatprep.subr.mxu0 0.0
        %495 = vmatpush1.msra.mxu0 0.0
        %496 = vmatprep.subr.mxu0 0.0
        %497 = vmatpush1.msra.mxu0 0.0
        %498 = vmatprep.subr.mxu0 0.0
        %499 = vmatpush1.msra.mxu0 0.0
        %500 = vmatprep.subr.mxu0 0.0
        %501 = vmatpush1.msra.mxu0 0.0
        %502 = vmatprep.subr.mxu0 0.0
        %503 = vmatpush1.msra.mxu0 0.0
        %504 = vmatprep.subr.mxu0 0.0
        %505 = vmatpush1.msra.mxu0 0.0
        %506 = vmatprep.subr.mxu0 0.0
        %507 = vmatpush1.msra.mxu0 0.0
        %508 = vmatprep.subr.mxu0 0.0
        %509 = vmatpush1.msra.mxu0 0.0
        %510 = vmatprep.subr.mxu0 0.0
        %511 = vmatpush1.msra.mxu0 0.0
        %512 = vmatprep.subr.mxu0 0.0
        %513 = vmatpush1.msra.mxu0 0.0
        %514 = vmatprep.mubr.f32.mxu0 0.0
        %515 = vmatmul.mubr.f32.gmra.mrb[0].mxu0 %v448
        %v516 = vpop.f32.mrb[0].mxu0
        %v517 = vadd.f32 0.0, %v516
        %v518 = vpop.f32.mrb[0].mxu0
        %519 = vdwg.mxu0
        %v520 = vld [vmem:[#allocation7] sm:$0xff]
        %521 = vrot.lane.b32.xlu0 %v352, 120
        %v522 = vpop.permute.xlu0 %521
        %523 = vrot.lane.b32.xlu0 %v352, 88
        %v524 = vpop.permute.xlu0 %523
        %v525 = vsel %vm358, %v522, 0
        %v527 = vsel %vm358, %v524, 0
        %529 = vmatprep.subr.mxu0 0.0
        %530 = vmatpush1.xpose.msra.mxu0 %v527
        %531 = vmatprep.subr.mxu0 0.0
        %532 = vmatpush1.xpose.msra.mxu0 0.0
        %533 = vmatprep.subr.mxu0 0.0
        %534 = vmatpush1.xpose.msra.mxu0 0.0
        %535 = vmatprep.subr.mxu0 0.0
        %536 = vmatpush1.xpose.msra.mxu0 0.0
        %537 = vmatprep.subr.mxu0 0.0
        %538 = vmatpush1.xpose.msra.mxu0 0.0
        %539 = vmatprep.subr.mxu0 0.0
        %540 = vmatpush1.xpose.msra.mxu0 0.0
        %541 = vmatprep.subr.mxu0 0.0
        %542 = vmatpush1.xpose.msra.mxu0 0.0
        %543 = vmatprep.subr.mxu0 0.0
        %544 = vmatpush1.xpose.msra.mxu0 0.0
        %545 = vmatprep.subr.mxu0 0.0
        %546 = vmatpush1.xpose.msra.mxu0 0.0
        %547 = vmatprep.subr.mxu0 0.0
        %548 = vmatpush1.xpose.msra.mxu0 0.0
        %549 = vmatprep.subr.mxu0 0.0
        %550 = vmatpush1.xpose.msra.mxu0 0.0
        %551 = vmatprep.subr.mxu0 0.0
        %552 = vmatpush1.xpose.msra.mxu0 0.0
        %553 = vmatprep.subr.mxu0 0.0
        %554 = vmatpush1.xpose.msra.mxu0 0.0
        %555 = vmatprep.subr.mxu0 0.0
        %556 = vmatpush1.xpose.msra.mxu0 0.0
        %557 = vmatprep.subr.mxu0 0.0
        %558 = vmatpush1.xpose.msra.mxu0 0.0
        %559 = vmatprep.subr.mxu0 0.0
        %560 = vmatpush1.xpose.msra.mxu0 0.0
        %561 = vmatprep.subr.mxu0 0.0
        %562 = vmatpush1.xpose.msra.mxu0 0.0
        %563 = vmatprep.subr.mxu0 0.0
        %564 = vmatpush1.xpose.msra.mxu0 0.0
        %565 = vmatprep.subr.mxu0 0.0
        %566 = vmatpush1.xpose.msra.mxu0 0.0
        %567 = vmatprep.subr.mxu0 0.0
        %568 = vmatpush1.xpose.msra.mxu0 0.0
        %569 = vmatprep.subr.mxu0 0.0
        %570 = vmatpush1.xpose.msra.mxu0 0.0
        %571 = vmatprep.subr.mxu0 0.0
        %572 = vmatpush1.xpose.msra.mxu0 0.0
        %573 = vmatprep.subr.mxu0 0.0
        %574 = vmatpush1.xpose.msra.mxu0 0.0
        %575 = vmatprep.subr.mxu0 0.0
        %576 = vmatpush1.xpose.msra.mxu0 0.0
        %577 = vmatprep.subr.mxu0 0.0
        %578 = vmatpush1.xpose.msra.mxu0 0.0
        %579 = vmatprep.subr.mxu0 0.0
        %580 = vmatpush1.xpose.msra.mxu0 0.0
        %581 = vmatprep.subr.mxu0 0.0
        %582 = vmatpush1.xpose.msra.mxu0 0.0
        %583 = vmatprep.subr.mxu0 0.0
        %584 = vmatpush1.xpose.msra.mxu0 0.0
        %585 = vmatprep.subr.mxu0 0.0
        %586 = vmatpush1.xpose.msra.mxu0 0.0
        %587 = vmatprep.subr.mxu0 0.0
        %588 = vmatpush1.xpose.msra.mxu0 0.0
        %589 = vmatprep.subr.mxu0 0.0
        %590 = vmatpush1.xpose.msra.mxu0 0.0
        %591 = vmatprep.subr.mxu0 0.0
        %592 = vmatpush1.xpose.msra.mxu0 0.0
        %593 = vmatprep.mubr.f32.mxu0 0.0
        %594 = vmatmul.mubr.f32.gmra.mrb[0].mxu0 %v525
        %v595 = vpop.f32.mrb[0].mxu0
        %v596 = vadd.f32 0.0, %v595
        %v597 = vpop.f32.mrb[0].mxu0
        %598 = vdwg.mxu0
        %v599 = vsel %vm358, %v596, -inf
        %600 = vmax.xlane.f32.xlu0 %v599
        %v601 = vpop.xlane.xlu0 %600
        %v602 = vsub.f32 %v596, %v601
        %v603 = vmul.f32 %v602, 1.442695
        %v604 = vpow.pop %v603
        %v605 = vsel %vm358, %v604, 0.0
        %606 = vadd.xlane.f32.xlu0 %v605
        %v607 = vpop.xlane.xlu0 %606
        %v608 = vrcp.pop %v607
        %v609 = vmul.f32 %v604, %v608
        %610 = vrot.lane.b32.xlu0 %v352, 56
        %v611 = vpop.permute.xlu0 %610
        %v614 = vsel %vm358, %v609, 0
        %616 = vmatprep.subr.mxu0 0.0
        %617 = vmatpush1.msra.mxu0 %v611
        %618 = vmatprep.subr.mxu0 0.0
        %619 = vmatpush1.msra.mxu0 0.0
        %620 = vmatprep.subr.mxu0 0.0
        %621 = vmatpush1.msra.mxu0 0.0
        %622 = vmatprep.subr.mxu0 0.0
        %623 = vmatpush1.msra.mxu0 0.0
        %624 = vmatprep.subr.mxu0 0.0
        %625 = vmatpush1.msra.mxu0 0.0
        %626 = vmatprep.subr.mxu0 0.0
        %627 = vmatpush1.msra.mxu0 0.0
        %628 = vmatprep.subr.mxu0 0.0
        %629 = vmatpush1.msra.mxu0 0.0
        %630 = vmatprep.subr.mxu0 0.0
        %631 = vmatpush1.msra.mxu0 0.0
        %632 = vmatprep.subr.mxu0 0.0
        %633 = vmatpush1.msra.mxu0 0.0
        %634 = vmatprep.subr.mxu0 0.0
        %635 = vmatpush1.msra.mxu0 0.0
        %636 = vmatprep.subr.mxu0 0.0
        %637 = vmatpush1.msra.mxu0 0.0
        %638 = vmatprep.subr.mxu0 0.0
        %639 = vmatpush1.msra.mxu0 0.0
        %640 = vmatprep.subr.mxu0 0.0
        %641 = vmatpush1.msra.mxu0 0.0
        %642 = vmatprep.subr.mxu0 0.0
        %643 = vmatpush1.msra.mxu0 0.0
        %644 = vmatprep.subr.mxu0 0.0
        %645 = vmatpush1.msra.mxu0 0.0
        %646 = vmatprep.subr.mxu0 0.0
        %647 = vmatpush1.msra.mxu0 0.0
        %648 = vmatprep.subr.mxu0 0.0
        %649 = vmatpush1.msra.mxu0 0.0
        %650 = vmatprep.subr.mxu0 0.0
        %651 = vmatpush1.msra.mxu0 0.0
        %652 = vmatprep.subr.mxu0 0.0
        %653 = vmatpush1.msra.mxu0 0.0
        %654 = vmatprep.subr.mxu0 0.0
        %655 = vmatpush1.msra.mxu0 0.0
        %656 = vmatprep.subr.mxu0 0.0
        %657 = vmatpush1.msra.mxu0 0.0
        %658 = vmatprep.subr.mxu0 0.0
        %659 = vmatpush1.msra.mxu0 0.0
        %660 = vmatprep.subr.mxu0 0.0
        %661 = vmatpush1.msra.mxu0 0.0
        %662 = vmatprep.subr.mxu0 0.0
        %663 = vmatpush1.msra.mxu0 0.0
        %664 = vmatprep.subr.mxu0 0.0
        %665 = vmatpush1.msra.mxu0 0.0
        %666 = vmatprep.subr.mxu0 0.0
        %667 = vmatpush1.msra.mxu0 0.0
        %668 = vmatprep.subr.mxu0 0.0
        %669 = vmatpush1.msra.mxu0 0.0
        %670 = vmatprep.subr.mxu0 0.0
        %671 = vmatpush1.msra.mxu0 0.0
        %672 = vmatprep.subr.mxu0 0.0
        %673 = vmatpush1.msra.mxu0 0.0
        %674 = vmatprep.subr.mxu0 0.0
        %675 = vmatpush1.msra.mxu0 0.0
        %676 = vmatprep.subr.mxu0 0.0
        %677 = vmatpush1.msra.mxu0 0.0
        %678 = vmatprep.subr.mxu0 0.0
        %679 = vmatpush1.msra.mxu0 0.0
        %680 = vmatprep.mubr.f32.mxu0 0.0
        %681 = vmatmul.mubr.f32.gmra.mrb[0].mxu0 %v614
        %v682 = vpop.f32.mrb[0].mxu0
        %v683 = vadd.f32 0.0, %v682
        %v684 = vpop.f32.mrb[0].mxu0
        %685 = vdwg.mxu0
        %s686 = scalar_lea.vmem [#allocation7], 8
        %v687 = vld [vmem:[%s686] sm:$0xff]
        %v689 = vsel %vm358, %v683, 0
        %691 = vmatprep.subr.mxu0 0.0
        %692 = vmatpush1.msra.mxu0 %v687
        %693 = vmatprep.subr.mxu0 0.0
        %694 = vmatpush1.msra.mxu0 0.0
        %695 = vmatprep.subr.mxu0 0.0
        %696 = vmatpush1.msra.mxu0 0.0
        %697 = vmatprep.subr.mxu0 0.0
        %698 = vmatpush1.msra.mxu0 0.0
        %699 = vmatprep.subr.mxu0 0.0
        %700 = vmatpush1.msra.mxu0 0.0
        %701 = vmatprep.subr.mxu0 0.0
        %702 = vmatpush1.msra.mxu0 0.0
        %703 = vmatprep.subr.mxu0 0.0
        %704 = vmatpush1.msra.mxu0 0.0
        %705 = vmatprep.subr.mxu0 0.0
        %706 = vmatpush1.msra.mxu0 0.0
        %707 = vmatprep.subr.mxu0 0.0
        %708 = vmatpush1.msra.mxu0 0.0
        %709 = vmatprep.subr.mxu0 0.0
        %710 = vmatpush1.msra.mxu0 0.0
        %711 = vmatprep.subr.mxu0 0.0
        %712 = vmatpush1.msra.mxu0 0.0
        %713 = vmatprep.subr.mxu0 0.0
        %714 = vmatpush1.msra.mxu0 0.0
        %715 = vmatprep.subr.mxu0 0.0
        %716 = vmatpush1.msra.mxu0 0.0
        %717 = vmatprep.subr.mxu0 0.0
        %718 = vmatpush1.msra.mxu0 0.0
        %719 = vmatprep.subr.mxu0 0.0
        %720 = vmatpush1.msra.mxu0 0.0
        %721 = vmatprep.subr.mxu0 0.0
        %722 = vmatpush1.msra.mxu0 0.0
        %723 = vmatprep.subr.mxu0 0.0
        %724 = vmatpush1.msra.mxu0 0.0
        %725 = vmatprep.subr.mxu0 0.0
        %726 = vmatpush1.msra.mxu0 0.0
        %727 = vmatprep.subr.mxu0 0.0
        %728 = vmatpush1.msra.mxu0 0.0
        %729 = vmatprep.subr.mxu0 0.0
        %730 = vmatpush1.msra.mxu0 0.0
        %731 = vmatprep.subr.mxu0 0.0
        %732 = vmatpush1.msra.mxu0 0.0
        %733 = vmatprep.subr.mxu0 0.0
        %734 = vmatpush1.msra.mxu0 0.0
        %735 = vmatprep.subr.mxu0 0.0
        %736 = vmatpush1.msra.mxu0 0.0
        %737 = vmatprep.subr.mxu0 0.0
        %738 = vmatpush1.msra.mxu0 0.0
        %739 = vmatprep.subr.mxu0 0.0
        %740 = vmatpush1.msra.mxu0 0.0
        %741 = vmatprep.subr.mxu0 0.0
        %742 = vmatpush1.msra.mxu0 0.0
        %743 = vmatprep.subr.mxu0 0.0
        %744 = vmatpush1.msra.mxu0 0.0
        %745 = vmatprep.subr.mxu0 0.0
        %746 = vmatpush1.msra.mxu0 0.0
        %747 = vmatprep.subr.mxu0 0.0
        %748 = vmatpush1.msra.mxu0 0.0
        %749 = vmatprep.subr.mxu0 0.0
        %750 = vmatpush1.msra.mxu0 0.0
        %751 = vmatprep.subr.mxu0 0.0
        %752 = vmatpush1.msra.mxu0 0.0
        %753 = vmatprep.subr.mxu0 0.0
        %754 = vmatpush1.msra.mxu0 0.0
        %755 = vmatprep.mubr.f32.mxu0 0.0
        %756 = vmatmul.mubr.f32.gmra.mrb[0].mxu0 %v689
        %v757 = vpop.f32.mrb[0].mxu0
        %v758 = vadd.f32 0.0, %v757
        %v759 = vpop.f32.mrb[0].mxu0
        %760 = vdwg.mxu0
        %v762 = vsel %vm358, %v517, 0
        %764 = vmatprep.subr.mxu0 0.0
        %765 = vmatpush1.msra.mxu0 %v520
        %766 = vmatprep.subr.mxu0 0.0
        %767 = vmatpush1.msra.mxu0 0.0
        %768 = vmatprep.subr.mxu0 0.0
        %769 = vmatpush1.msra.mxu0 0.0
        %770 = vmatprep.subr.mxu0 0.0
        %771 = vmatpush1.msra.mxu0 0.0
        %772 = vmatprep.subr.mxu0 0.0
        %773 = vmatpush1.msra.mxu0 0.0
        %774 = vmatprep.subr.mxu0 0.0
        %775 = vmatpush1.msra.mxu0 0.0
        %776 = vmatprep.subr.mxu0 0.0
        %777 = vmatpush1.msra.mxu0 0.0
        %778 = vmatprep.subr.mxu0 0.0
        %779 = vmatpush1.msra.mxu0 0.0
        %780 = vmatprep.subr.mxu0 0.0
        %781 = vmatpush1.msra.mxu0 0.0
        %782 = vmatprep.subr.mxu0 0.0
        %783 = vmatpush1.msra.mxu0 0.0
        %784 = vmatprep.subr.mxu0 0.0
        %785 = vmatpush1.msra.mxu0 0.0
        %786 = vmatprep.subr.mxu0 0.0
        %787 = vmatpush1.msra.mxu0 0.0
        %788 = vmatprep.subr.mxu0 0.0
        %789 = vmatpush1.msra.mxu0 0.0
        %790 = vmatprep.subr.mxu0 0.0
        %791 = vmatpush1.msra.mxu0 0.0
        %792 = vmatprep.subr.mxu0 0.0
        %793 = vmatpush1.msra.mxu0 0.0
        %794 = vmatprep.subr.mxu0 0.0
        %795 = vmatpush1.msra.mxu0 0.0
        %796 = vmatprep.subr.mxu0 0.0
        %797 = vmatpush1.msra.mxu0 0.0
        %798 = vmatprep.subr.mxu0 0.0
        %799 = vmatpush1.msra.mxu0 0.0
        %800 = vmatprep.subr.mxu0 0.0
        %801 = vmatpush1.msra.mxu0 0.0
        %802 = vmatprep.subr.mxu0 0.0
        %803 = vmatpush1.msra.mxu0 0.0
        %804 = vmatprep.subr.mxu0 0.0
        %805 = vmatpush1.msra.mxu0 0.0
        %806 = vmatprep.subr.mxu0 0.0
        %807 = vmatpush1.msra.mxu0 0.0
        %808 = vmatprep.subr.mxu0 0.0
        %809 = vmatpush1.msra.mxu0 0.0
        %810 = vmatprep.subr.mxu0 0.0
        %811 = vmatpush1.msra.mxu0 0.0
        %812 = vmatprep.subr.mxu0 0.0
        %813 = vmatpush1.msra.mxu0 0.0
        %814 = vmatprep.subr.mxu0 0.0
        %815 = vmatpush1.msra.mxu0 0.0
        %816 = vmatprep.subr.mxu0 0.0
        %817 = vmatpush1.msra.mxu0 0.0
        %818 = vmatprep.subr.mxu0 0.0
        %819 = vmatpush1.msra.mxu0 0.0
        %820 = vmatprep.subr.mxu0 0.0
        %821 = vmatpush1.msra.mxu0 0.0
        %822 = vmatprep.subr.mxu0 0.0
        %823 = vmatpush1.msra.mxu0 0.0
        %824 = vmatprep.subr.mxu0 0.0
        %825 = vmatpush1.msra.mxu0 0.0
        %826 = vmatprep.subr.mxu0 0.0
        %827 = vmatpush1.msra.mxu0 0.0
        %828 = vmatprep.mubr.f32.mxu0 0.0
        %829 = vmatmul.mubr.f32.gmra.mrb[0].mxu0 %v762
        %v830 = vpop.f32.mrb[0].mxu0
        %v831 = vadd.f32 %v758, %v830
        %v832 = vpop.f32.mrb[0].mxu0
        %833 = vdwg.mxu0
        %834 = vrot.lane.b32.xlu0 %v352, 112
        %v835 = vpop.permute.xlu0 %834
        %836 = vrot.lane.b32.xlu0 %v352, 80
        %v837 = vpop.permute.xlu0 %836
        %v838 = vsel %vm358, %v835, 0
        %v840 = vsel %vm358, %v837, 0
        %842 = vmatprep.subr.mxu0 0.0
        %843 = vmatpush1.xpose.msra.mxu0 %v840
        %844 = vmatprep.subr.mxu0 0.0
        %845 = vmatpush1.xpose.msra.mxu0 0.0
        %846 = vmatprep.subr.mxu0 0.0
        %847 = vmatpush1.xpose.msra.mxu0 0.0
        %848 = vmatprep.subr.mxu0 0.0
        %849 = vmatpush1.xpose.msra.mxu0 0.0
        %850 = vmatprep.subr.mxu0 0.0
        %851 = vmatpush1.xpose.msra.mxu0 0.0
        %852 = vmatprep.subr.mxu0 0.0
        %853 = vmatpush1.xpose.msra.mxu0 0.0
        %854 = vmatprep.subr.mxu0 0.0
        %855 = vmatpush1.xpose.msra.mxu0 0.0
        %856 = vmatprep.subr.mxu0 0.0
        %857 = vmatpush1.xpose.msra.mxu0 0.0
        %858 = vmatprep.subr.mxu0 0.0
        %859 = vmatpush1.xpose.msra.mxu0 0.0
        %860 = vmatprep.subr.mxu0 0.0
        %861 = vmatpush1.xpose.msra.mxu0 0.0
        %862 = vmatprep.subr.mxu0 0.0
        %863 = vmatpush1.xpose.msra.mxu0 0.0
        %864 = vmatprep.subr.mxu0 0.0
        %865 = vmatpush1.xpose.msra.mxu0 0.0
        %866 = vmatprep.subr.mxu0 0.0
        %867 = vmatpush1.xpose.msra.mxu0 0.0
        %868 = vmatprep.subr.mxu0 0.0
        %869 = vmatpush1.xpose.msra.mxu0 0.0
        %870 = vmatprep.subr.mxu0 0.0
        %871 = vmatpush1.xpose.msra.mxu0 0.0
        %872 = vmatprep.subr.mxu0 0.0
        %873 = vmatpush1.xpose.msra.mxu0 0.0
        %874 = vmatprep.subr.mxu0 0.0
        %875 = vmatpush1.xpose.msra.mxu0 0.0
        %876 = vmatprep.subr.mxu0 0.0
        %877 = vmatpush1.xpose.msra.mxu0 0.0
        %878 = vmatprep.subr.mxu0 0.0
        %879 = vmatpush1.xpose.msra.mxu0 0.0
        %880 = vmatprep.subr.mxu0 0.0
        %881 = vmatpush1.xpose.msra.mxu0 0.0
        %882 = vmatprep.subr.mxu0 0.0
        %883 = vmatpush1.xpose.msra.mxu0 0.0
        %884 = vmatprep.subr.mxu0 0.0
        %885 = vmatpush1.xpose.msra.mxu0 0.0
        %886 = vmatprep.subr.mxu0 0.0
        %887 = vmatpush1.xpose.msra.mxu0 0.0
        %888 = vmatprep.subr.mxu0 0.0
        %889 = vmatpush1.xpose.msra.mxu0 0.0
        %890 = vmatprep.subr.mxu0 0.0
        %891 = vmatpush1.xpose.msra.mxu0 0.0
        %892 = vmatprep.subr.mxu0 0.0
        %893 = vmatpush1.xpose.msra.mxu0 0.0
        %894 = vmatprep.subr.mxu0 0.0
        %895 = vmatpush1.xpose.msra.mxu0 0.0
        %896 = vmatprep.subr.mxu0 0.0
        %897 = vmatpush1.xpose.msra.mxu0 0.0
        %898 = vmatprep.subr.mxu0 0.0
        %899 = vmatpush1.xpose.msra.mxu0 0.0
        %900 = vmatprep.subr.mxu0 0.0
        %901 = vmatpush1.xpose.msra.mxu0 0.0
        %902 = vmatprep.subr.mxu0 0.0
        %903 = vmatpush1.xpose.msra.mxu0 0.0
        %904 = vmatprep.subr.mxu0 0.0
        %905 = vmatpush1.xpose.msra.mxu0 0.0
        %906 = vmatprep.mubr.f32.mxu0 0.0
        %907 = vmatmul.mubr.f32.gmra.mrb[0].mxu0 %v838
        %v908 = vpop.f32.mrb[0].mxu0
        %v909 = vadd.f32 0.0, %v908
        %v910 = vpop.f32.mrb[0].mxu0
        %911 = vdwg.mxu0
        %v912 = vsel %vm358, %v909, -inf
        %913 = vmax.xlane.f32.xlu0 %v912
        %v914 = vpop.xlane.xlu0 %913
        %v915 = vsub.f32 %v909, %v914
        %v916 = vmul.f32 %v915, 1.442695
        %v917 = vpow.pop %v916
        %v918 = vsel %vm358, %v917, 0.0
        %919 = vadd.xlane.f32.xlu0 %v918
        %v920 = vpop.xlane.xlu0 %919
        %v921 = vrcp.pop %v920
        %v922 = vmul.f32 %v917, %v921
        %923 = vrot.lane.b32.xlu0 %v352, 48
        %v924 = vpop.permute.xlu0 %923
        %v927 = vsel %vm358, %v922, 0
        %929 = vmatprep.subr.mxu0 0.0
        %930 = vmatpush1.msra.mxu0 %v924
        %931 = vmatprep.subr.mxu0 0.0
        %932 = vmatpush1.msra.mxu0 0.0
        %933 = vmatprep.subr.mxu0 0.0
        %934 = vmatpush1.msra.mxu0 0.0
        %935 = vmatprep.subr.mxu0 0.0
        %936 = vmatpush1.msra.mxu0 0.0
        %937 = vmatprep.subr.mxu0 0.0
        %938 = vmatpush1.msra.mxu0 0.0
        %939 = vmatprep.subr.mxu0 0.0
        %940 = vmatpush1.msra.mxu0 0.0
        %941 = vmatprep.subr.mxu0 0.0
        %942 = vmatpush1.msra.mxu0 0.0
        %943 = vmatprep.subr.mxu0 0.0
        %944 = vmatpush1.msra.mxu0 0.0
        %945 = vmatprep.subr.mxu0 0.0
        %946 = vmatpush1.msra.mxu0 0.0
        %947 = vmatprep.subr.mxu0 0.0
        %948 = vmatpush1.msra.mxu0 0.0
        %949 = vmatprep.subr.mxu0 0.0
        %950 = vmatpush1.msra.mxu0 0.0
        %951 = vmatprep.subr.mxu0 0.0
        %952 = vmatpush1.msra.mxu0 0.0
        %953 = vmatprep.subr.mxu0 0.0
        %954 = vmatpush1.msra.mxu0 0.0
        %955 = vmatprep.subr.mxu0 0.0
        %956 = vmatpush1.msra.mxu0 0.0
        %957 = vmatprep.subr.mxu0 0.0
        %958 = vmatpush1.msra.mxu0 0.0
        %959 = vmatprep.subr.mxu0 0.0
        %960 = vmatpush1.msra.mxu0 0.0
        %961 = vmatprep.subr.mxu0 0.0
        %962 = vmatpush1.msra.mxu0 0.0
        %963 = vmatprep.subr.mxu0 0.0
        %964 = vmatpush1.msra.mxu0 0.0
        %965 = vmatprep.subr.mxu0 0.0
        %966 = vmatpush1.msra.mxu0 0.0
        %967 = vmatprep.subr.mxu0 0.0
        %968 = vmatpush1.msra.mxu0 0.0
        %969 = vmatprep.subr.mxu0 0.0
        %970 = vmatpush1.msra.mxu0 0.0
        %971 = vmatprep.subr.mxu0 0.0
        %972 = vmatpush1.msra.mxu0 0.0
        %973 = vmatprep.subr.mxu0 0.0
        %974 = vmatpush1.msra.mxu0 0.0
        %975 = vmatprep.subr.mxu0 0.0
        %976 = vmatpush1.msra.mxu0 0.0
        %977 = vmatprep.subr.mxu0 0.0
        %978 = vmatpush1.msra.mxu0 0.0
        %979 = vmatprep.subr.mxu0 0.0
        %980 = vmatpush1.msra.mxu0 0.0
        %981 = vmatprep.subr.mxu0 0.0
        %982 = vmatpush1.msra.mxu0 0.0
        %983 = vmatprep.subr.mxu0 0.0
        %984 = vmatpush1.msra.mxu0 0.0
        %985 = vmatprep.subr.mxu0 0.0
        %986 = vmatpush1.msra.mxu0 0.0
        %987 = vmatprep.subr.mxu0 0.0
        %988 = vmatpush1.msra.mxu0 0.0
        %989 = vmatprep.subr.mxu0 0.0
        %990 = vmatpush1.msra.mxu0 0.0
        %991 = vmatprep.subr.mxu0 0.0
        %992 = vmatpush1.msra.mxu0 0.0
        %993 = vmatprep.mubr.f32.mxu0 0.0
        %994 = vmatmul.mubr.f32.gmra.mrb[0].mxu0 %v927
        %v995 = vpop.f32.mrb[0].mxu0
        %v996 = vadd.f32 0.0, %v995
        %v997 = vpop.f32.mrb[0].mxu0
        %998 = vdwg.mxu0
        %s999 = scalar_lea.vmem [#allocation7], 16
        %v1000 = vld [vmem:[%s999] sm:$0xff]
        %v1002 = vsel %vm358, %v996, 0
        %1004 = vmatprep.subr.mxu0 0.0
        %1005 = vmatpush1.msra.mxu0 %v1000
        %1006 = vmatprep.subr.mxu0 0.0
        %1007 = vmatpush1.msra.mxu0 0.0
        %1008 = vmatprep.subr.mxu0 0.0
        %1009 = vmatpush1.msra.mxu0 0.0
        %1010 = vmatprep.subr.mxu0 0.0
        %1011 = vmatpush1.msra.mxu0 0.0
        %1012 = vmatprep.subr.mxu0 0.0
        %1013 = vmatpush1.msra.mxu0 0.0
        %1014 = vmatprep.subr.mxu0 0.0
        %1015 = vmatpush1.msra.mxu0 0.0
        %1016 = vmatprep.subr.mxu0 0.0
        %1017 = vmatpush1.msra.mxu0 0.0
        %1018 = vmatprep.subr.mxu0 0.0
        %1019 = vmatpush1.msra.mxu0 0.0
        %1020 = vmatprep.subr.mxu0 0.0
        %1021 = vmatpush1.msra.mxu0 0.0
        %1022 = vmatprep.subr.mxu0 0.0
        %1023 = vmatpush1.msra.mxu0 0.0
        %1024 = vmatprep.subr.mxu0 0.0
        %1025 = vmatpush1.msra.mxu0 0.0
        %1026 = vmatprep.subr.mxu0 0.0
        %1027 = vmatpush1.msra.mxu0 0.0
        %1028 = vmatprep.subr.mxu0 0.0
        %1029 = vmatpush1.msra.mxu0 0.0
        %1030 = vmatprep.subr.mxu0 0.0
        %1031 = vmatpush1.msra.mxu0 0.0
        %1032 = vmatprep.subr.mxu0 0.0
        %1033 = vmatpush1.msra.mxu0 0.0
        %1034 = vmatprep.subr.mxu0 0.0
        %1035 = vmatpush1.msra.mxu0 0.0
        %1036 = vmatprep.subr.mxu0 0.0
        %1037 = vmatpush1.msra.mxu0 0.0
        %1038 = vmatprep.subr.mxu0 0.0
        %1039 = vmatpush1.msra.mxu0 0.0
        %1040 = vmatprep.subr.mxu0 0.0
        %1041 = vmatpush1.msra.mxu0 0.0
        %1042 = vmatprep.subr.mxu0 0.0
        %1043 = vmatpush1.msra.mxu0 0.0
        %1044 = vmatprep.subr.mxu0 0.0
        %1045 = vmatpush1.msra.mxu0 0.0
        %1046 = vmatprep.subr.mxu0 0.0
        %1047 = vmatpush1.msra.mxu0 0.0
        %1048 = vmatprep.subr.mxu0 0.0
        %1049 = vmatpush1.msra.mxu0 0.0
        %1050 = vmatprep.subr.mxu0 0.0
        %1051 = vmatpush1.msra.mxu0 0.0
        %1052 = vmatprep.subr.mxu0 0.0
        %1053 = vmatpush1.msra.mxu0 0.0
        %1054 = vmatprep.subr.mxu0 0.0
        %1055 = vmatpush1.msra.mxu0 0.0
        %1056 = vmatprep.subr.mxu0 0.0
        %1057 = vmatpush1.msra.mxu0 0.0
        %1058 = vmatprep.subr.mxu0 0.0
        %1059 = vmatpush1.msra.mxu0 0.0
        %1060 = vmatprep.subr.mxu0 0.0
        %1061 = vmatpush1.msra.mxu0 0.0
        %1062 = vmatprep.subr.mxu0 0.0
        %1063 = vmatpush1.msra.mxu0 0.0
        %1064 = vmatprep.subr.mxu0 0.0
        %1065 = vmatpush1.msra.mxu0 0.0
        %1066 = vmatprep.subr.mxu0 0.0
        %1067 = vmatpush1.msra.mxu0 0.0
        %1068 = vmatprep.mubr.f32.mxu0 0.0
        %1069 = vmatmul.mubr.f32.gmra.mrb[0].mxu0 %v1002
        %v1070 = vpop.f32.mrb[0].mxu0
        %v1071 = vadd.f32 0.0, %v1070
        %v1072 = vpop.f32.mrb[0].mxu0
        %1073 = vdwg.mxu0
        %v1074 = vadd.f32 %v831, %v1071
        %1075 = vrot.lane.b32.xlu0 %v352, 104
        %v1076 = vpop.permute.xlu0 %1075
        %1077 = vrot.lane.b32.xlu0 %v352, 72
        %v1078 = vpop.permute.xlu0 %1077
        %v1079 = vsel %vm358, %v1076, 0
        %v1081 = vsel %vm358, %v1078, 0
        %1083 = vmatprep.subr.mxu0 0.0
        %1084 = vmatpush1.xpose.msra.mxu0 %v1081
        %1085 = vmatprep.subr.mxu0 0.0
        %1086 = vmatpush1.xpose.msra.mxu0 0.0
        %1087 = vmatprep.subr.mxu0 0.0
        %1088 = vmatpush1.xpose.msra.mxu0 0.0
        %1089 = vmatprep.subr.mxu0 0.0
        %1090 = vmatpush1.xpose.msra.mxu0 0.0
        %1091 = vmatprep.subr.mxu0 0.0
        %1092 = vmatpush1.xpose.msra.mxu0 0.0
        %1093 = vmatprep.subr.mxu0 0.0
        %1094 = vmatpush1.xpose.msra.mxu0 0.0
        %1095 = vmatprep.subr.mxu0 0.0
        %1096 = vmatpush1.xpose.msra.mxu0 0.0
        %1097 = vmatprep.subr.mxu0 0.0
        %1098 = vmatpush1.xpose.msra.mxu0 0.0
        %1099 = vmatprep.subr.mxu0 0.0
        %1100 = vmatpush1.xpose.msra.mxu0 0.0
        %1101 = vmatprep.subr.mxu0 0.0
        %1102 = vmatpush1.xpose.msra.mxu0 0.0
        %1103 = vmatprep.subr.mxu0 0.0
        %1104 = vmatpush1.xpose.msra.mxu0 0.0
        %1105 = vmatprep.subr.mxu0 0.0
        %1106 = vmatpush1.xpose.msra.mxu0 0.0
        %1107 = vmatprep.subr.mxu0 0.0
        %1108 = vmatpush1.xpose.msra.mxu0 0.0
        %1109 = vmatprep.subr.mxu0 0.0
        %1110 = vmatpush1.xpose.msra.mxu0 0.0
        %1111 = vmatprep.subr.mxu0 0.0
        %1112 = vmatpush1.xpose.msra.mxu0 0.0
        %1113 = vmatprep.subr.mxu0 0.0
        %1114 = vmatpush1.xpose.msra.mxu0 0.0
        %1115 = vmatprep.subr.mxu0 0.0
        %1116 = vmatpush1.xpose.msra.mxu0 0.0
        %1117 = vmatprep.subr.mxu0 0.0
        %1118 = vmatpush1.xpose.msra.mxu0 0.0
        %1119 = vmatprep.subr.mxu0 0.0
        %1120 = vmatpush1.xpose.msra.mxu0 0.0
        %1121 = vmatprep.subr.mxu0 0.0
        %1122 = vmatpush1.xpose.msra.mxu0 0.0
        %1123 = vmatprep.subr.mxu0 0.0
        %1124 = vmatpush1.xpose.msra.mxu0 0.0
        %1125 = vmatprep.subr.mxu0 0.0
        %1126 = vmatpush1.xpose.msra.mxu0 0.0
        %1127 = vmatprep.subr.mxu0 0.0
        %1128 = vmatpush1.xpose.msra.mxu0 0.0
        %1129 = vmatprep.subr.mxu0 0.0
        %1130 = vmatpush1.xpose.msra.mxu0 0.0
        %1131 = vmatprep.subr.mxu0 0.0
        %1132 = vmatpush1.xpose.msra.mxu0 0.0
        %1133 = vmatprep.subr.mxu0 0.0
        %1134 = vmatpush1.xpose.msra.mxu0 0.0
        %1135 = vmatprep.subr.mxu0 0.0
        %1136 = vmatpush1.xpose.msra.mxu0 0.0
        %1137 = vmatprep.subr.mxu0 0.0
        %1138 = vmatpush1.xpose.msra.mxu0 0.0
        %1139 = vmatprep.subr.mxu0 0.0
        %1140 = vmatpush1.xpose.msra.mxu0 0.0
        %1141 = vmatprep.subr.mxu0 0.0
        %1142 = vmatpush1.xpose.msra.mxu0 0.0
        %1143 = vmatprep.subr.mxu0 0.0
        %1144 = vmatpush1.xpose.msra.mxu0 0.0
        %1145 = vmatprep.subr.mxu0 0.0
        %1146 = vmatpush1.xpose.msra.mxu0 0.0
        %1147 = vmatprep.mubr.f32.mxu0 0.0
        %1148 = vmatmul.mubr.f32.gmra.mrb[0].mxu0 %v1079
        %v1149 = vpop.f32.mrb[0].mxu0
        %v1150 = vadd.f32 0.0, %v1149
        %v1151 = vpop.f32.mrb[0].mxu0
        %1152 = vdwg.mxu0
        %v1153 = vsel %vm358, %v1150, -inf
        %1154 = vmax.xlane.f32.xlu0 %v1153
        %v1155 = vpop.xlane.xlu0 %1154
        %v1156 = vsub.f32 %v1150, %v1155
        %v1157 = vmul.f32 %v1156, 1.442695
        %v1158 = vpow.pop %v1157
        %v1159 = vsel %vm358, %v1158, 0.0
        %1160 = vadd.xlane.f32.xlu0 %v1159
        %v1161 = vpop.xlane.xlu0 %1160
        %v1162 = vrcp.pop %v1161
        %v1163 = vmul.f32 %v1158, %v1162
        %1164 = vrot.lane.b32.xlu0 %v352, 40
        %v1165 = vpop.permute.xlu0 %1164
        %v1168 = vsel %vm358, %v1163, 0
        %1170 = vmatprep.subr.mxu0 0.0
        %1171 = vmatpush1.msra.mxu0 %v1165
        %1172 = vmatprep.subr.mxu0 0.0
        %1173 = vmatpush1.msra.mxu0 0.0
        %1174 = vmatprep.subr.mxu0 0.0
        %1175 = vmatpush1.msra.mxu0 0.0
        %1176 = vmatprep.subr.mxu0 0.0
        %1177 = vmatpush1.msra.mxu0 0.0
        %1178 = vmatprep.subr.mxu0 0.0
        %1179 = vmatpush1.msra.mxu0 0.0
        %1180 = vmatprep.subr.mxu0 0.0
        %1181 = vmatpush1.msra.mxu0 0.0
        %1182 = vmatprep.subr.mxu0 0.0
        %1183 = vmatpush1.msra.mxu0 0.0
        %1184 = vmatprep.subr.mxu0 0.0
        %1185 = vmatpush1.msra.mxu0 0.0
        %1186 = vmatprep.subr.mxu0 0.0
        %1187 = vmatpush1.msra.mxu0 0.0
        %1188 = vmatprep.subr.mxu0 0.0
        %1189 = vmatpush1.msra.mxu0 0.0
        %1190 = vmatprep.subr.mxu0 0.0
        %1191 = vmatpush1.msra.mxu0 0.0
        %1192 = vmatprep.subr.mxu0 0.0
        %1193 = vmatpush1.msra.mxu0 0.0
        %1194 = vmatprep.subr.mxu0 0.0
        %1195 = vmatpush1.msra.mxu0 0.0
        %1196 = vmatprep.subr.mxu0 0.0
        %1197 = vmatpush1.msra.mxu0 0.0
        %1198 = vmatprep.subr.mxu0 0.0
        %1199 = vmatpush1.msra.mxu0 0.0
        %1200 = vmatprep.subr.mxu0 0.0
        %1201 = vmatpush1.msra.mxu0 0.0
        %1202 = vmatprep.subr.mxu0 0.0
        %1203 = vmatpush1.msra.mxu0 0.0
        %1204 = vmatprep.subr.mxu0 0.0
        %1205 = vmatpush1.msra.mxu0 0.0
        %1206 = vmatprep.subr.mxu0 0.0
        %1207 = vmatpush1.msra.mxu0 0.0
        %1208 = vmatprep.subr.mxu0 0.0
        %1209 = vmatpush1.msra.mxu0 0.0
        %1210 = vmatprep.subr.mxu0 0.0
        %1211 = vmatpush1.msra.mxu0 0.0
        %1212 = vmatprep.subr.mxu0 0.0
        %1213 = vmatpush1.msra.mxu0 0.0
        %1214 = vmatprep.subr.mxu0 0.0
        %1215 = vmatpush1.msra.mxu0 0.0
        %1216 = vmatprep.subr.mxu0 0.0
        %1217 = vmatpush1.msra.mxu0 0.0
        %1218 = vmatprep.subr.mxu0 0.0
        %1219 = vmatpush1.msra.mxu0 0.0
        %1220 = vmatprep.subr.mxu0 0.0
        %1221 = vmatpush1.msra.mxu0 0.0
        %1222 = vmatprep.subr.mxu0 0.0
        %1223 = vmatpush1.msra.mxu0 0.0
        %1224 = vmatprep.subr.mxu0 0.0
        %1225 = vmatpush1.msra.mxu0 0.0
        %1226 = vmatprep.subr.mxu0 0.0
        %1227 = vmatpush1.msra.mxu0 0.0
        %1228 = vmatprep.subr.mxu0 0.0
        %1229 = vmatpush1.msra.mxu0 0.0
        %1230 = vmatprep.subr.mxu0 0.0
        %1231 = vmatpush1.msra.mxu0 0.0
        %1232 = vmatprep.subr.mxu0 0.0
        %1233 = vmatpush1.msra.mxu0 0.0
        %1234 = vmatprep.mubr.f32.mxu0 0.0
        %1235 = vmatmul.mubr.f32.gmra.mrb[0].mxu0 %v1168
        %v1236 = vpop.f32.mrb[0].mxu0
        %v1237 = vadd.f32 0.0, %v1236
        %v1238 = vpop.f32.mrb[0].mxu0
        %1239 = vdwg.mxu0
        %s1240 = scalar_lea.vmem [#allocation7], 24
        %v1241 = vld [vmem:[%s1240] sm:$0xff]
        %v1243 = vsel %vm358, %v1237, 0
        %1245 = vmatprep.subr.mxu0 0.0
        %1246 = vmatpush1.msra.mxu0 %v1241
        %1247 = vmatprep.subr.mxu0 0.0
        %1248 = vmatpush1.msra.mxu0 0.0
        %1249 = vmatprep.subr.mxu0 0.0
        %1250 = vmatpush1.msra.mxu0 0.0
        %1251 = vmatprep.subr.mxu0 0.0
        %1252 = vmatpush1.msra.mxu0 0.0
        %1253 = vmatprep.subr.mxu0 0.0
        %1254 = vmatpush1.msra.mxu0 0.0
        %1255 = vmatprep.subr.mxu0 0.0
        %1256 = vmatpush1.msra.mxu0 0.0
        %1257 = vmatprep.subr.mxu0 0.0
        %1258 = vmatpush1.msra.mxu0 0.0
        %1259 = vmatprep.subr.mxu0 0.0
        %1260 = vmatpush1.msra.mxu0 0.0
        %1261 = vmatprep.subr.mxu0 0.0
        %1262 = vmatpush1.msra.mxu0 0.0
        %1263 = vmatprep.subr.mxu0 0.0
        %1264 = vmatpush1.msra.mxu0 0.0
        %1265 = vmatprep.subr.mxu0 0.0
        %1266 = vmatpush1.msra.mxu0 0.0
        %1267 = vmatprep.subr.mxu0 0.0
        %1268 = vmatpush1.msra.mxu0 0.0
        %1269 = vmatprep.subr.mxu0 0.0
        %1270 = vmatpush1.msra.mxu0 0.0
        %1271 = vmatprep.subr.mxu0 0.0
        %1272 = vmatpush1.msra.mxu0 0.0
        %1273 = vmatprep.subr.mxu0 0.0
        %1274 = vmatpush1.msra.mxu0 0.0
        %1275 = vmatprep.subr.mxu0 0.0
        %1276 = vmatpush1.msra.mxu0 0.0
        %1277 = vmatprep.subr.mxu0 0.0
        %1278 = vmatpush1.msra.mxu0 0.0
        %1279 = vmatprep.subr.mxu0 0.0
        %1280 = vmatpush1.msra.mxu0 0.0
        %1281 = vmatprep.subr.mxu0 0.0
        %1282 = vmatpush1.msra.mxu0 0.0
        %1283 = vmatprep.subr.mxu0 0.0
        %1284 = vmatpush1.msra.mxu0 0.0
        %1285 = vmatprep.subr.mxu0 0.0
        %1286 = vmatpush1.msra.mxu0 0.0
        %1287 = vmatprep.subr.mxu0 0.0
        %1288 = vmatpush1.msra.mxu0 0.0
        %1289 = vmatprep.subr.mxu0 0.0
        %1290 = vmatpush1.msra.mxu0 0.0
        %1291 = vmatprep.subr.mxu0 0.0
        %1292 = vmatpush1.msra.mxu0 0.0
        %1293 = vmatprep.subr.mxu0 0.0
        %1294 = vmatpush1.msra.mxu0 0.0
        %1295 = vmatprep.subr.mxu0 0.0
        %1296 = vmatpush1.msra.mxu0 0.0
        %1297 = vmatprep.subr.mxu0 0.0
        %1298 = vmatpush1.msra.mxu0 0.0
        %1299 = vmatprep.subr.mxu0 0.0
        %1300 = vmatpush1.msra.mxu0 0.0
        %1301 = vmatprep.subr.mxu0 0.0
        %1302 = vmatpush1.msra.mxu0 0.0
        %1303 = vmatprep.subr.mxu0 0.0
        %1304 = vmatpush1.msra.mxu0 0.0
        %1305 = vmatprep.subr.mxu0 0.0
        %1306 = vmatpush1.msra.mxu0 0.0
        %1307 = vmatprep.subr.mxu0 0.0
        %1308 = vmatpush1.msra.mxu0 0.0
        %1309 = vmatprep.mubr.f32.mxu0 0.0
        %1310 = vmatmul.mubr.f32.gmra.mrb[0].mxu0 %v1243
        %v1311 = vpop.f32.mrb[0].mxu0
        %v1312 = vadd.f32 0.0, %v1311
        %v1313 = vpop.f32.mrb[0].mxu0
        %1314 = vdwg.mxu0
        %v1315 = vadd.f32 %v1074, %v1312
        %v1316 = vld [vmem:[%s4] sm:$0x1]
        %v1318 = vlaneseq
        %v1319 = vshrl.u32 %v1318, 7
        %v1320 = vsub.s32 0, %v1319
        %v1321 = vrot.slane %v1316, %v1320
        %v1323 = vadd.f32 %v1315, %v1321
        %1324 = vst.msk [vmem:[%s268] sm:$0xff] %vm281, %v1323
        %s1325 = sand.u32 %s141, 1
        %s1326 = scalar_lea.sflag [#allocation4], %s1325
        %s1327 = sand.u32 %s141, 1
        %s1328 = smul.addr %s1327, 8
        %s1329 = scalar_lea.vmem [#allocation8], %s1328
        // Predicated region
        $region53: #{tpu_custom_call.1} parent=39 // pred_check
          %p1330 = pneg %p151
        $region54: #{tpu_custom_call.1} parent=39 // pred_check_branch
          %1332 = sbr.rel (%p1330) target = $region56
        $region55: #{tpu_custom_call.1} parent=39 // pred_region
          %s1334 = ssub.s32 128, 128
          %1335 = vsyncadd %s1326, %s1334
          %s1336 = smul.addr %s23, 128
          %s1337 = scalar_lea.hbm %s5, %s1336
          %s1339 = sshll.u32 %s1329, 4
          %s1340 = int_to_ptr.vmem [resolvable:$true] %s1339
          %1342 = dma.vmem_to_hbm [thread:$0]  %s1340, 128, %s1337, %s1326
        $region56: #{tpu_custom_call.1} parent=39 // pred_fallthru
          _
      $region40: #{tpu_custom_call.1} parent=5 // pred_fallthru
        _
      %p1343 = scmp.le.s32.totalorder 2, %s18
      // Predicated region
      $region57: #{tpu_custom_call.1} parent=5 // pred_check
        %p1344 = pneg %p1343
      $region58: #{tpu_custom_call.1} parent=5 // pred_check_branch
        %1346 = sbr.rel (%p1344) target = $region60
      $region59: #{tpu_custom_call.1} parent=5 // pred_region
        %s1347 = ssub.s32 %s18, 2
        // Predicated region
        $region61: #{tpu_custom_call.1} parent=59 // pred_check
          %p1348 = pneg %p157
        $region62: #{tpu_custom_call.1} parent=59 // pred_check_branch
          %1350 = sbr.rel (%p1348) target = $region64
        $region63: #{tpu_custom_call.1} parent=59 // pred_region
          %s1351 = sand.u32 %s142, 1
          %s1352 = scalar_lea.sflag [#allocation4], %s1351
          %s1353 = sand.u32 %s142, 1
          %s1354 = smul.addr %s1353, 8
          %s1355 = scalar_lea.vmem [#allocation8], %s1354
          %1356 = dma.done %s1352, 128
        $region64: #{tpu_custom_call.1} parent=59 // pred_fallthru
          _
      $region60: #{tpu_custom_call.1} parent=5 // pred_fallthru
        _
    $region6: #{tpu_custom_call.1} parent=1 // loop_footer
      %s22 = sadd.s32 1, %s18
    $region7: #{tpu_custom_call.1} parent=1 // loop_footer_branch
      %17 = sbr.rel target = $region3
    $region8: #{tpu_custom_call.1} parent=1 // loop_exit
      _
    %1357 = vsyncpa [#allocation3], 1
    %s1358 = scalar_lea.sflag [#allocation3], 1
    %1359 = vsyncpa %s1358, 1
    %1360 = vsyncpa [#allocation6], 1
    %1361 = vsyncpa [#allocation4], 1
    %s1362 = scalar_lea.sflag [#allocation4], 1
    %1363 = vsyncpa %s1362, 1

</llo_original>
